<compile_context>
chip_gen: v7x
topology: tpu7x:2x2x1
jax: 0.10.0
libtpu: 0.0.40
codegen_flags: <defaults>
</compile_context>

<pallas_src>
import math
import functools

import jax
import jax.numpy as jnp
from jax.experimental import pallas as pl
from jax.experimental.pallas import tpu as pltpu

MIB = 1024 * 1024


# --------------------------------------------------------------------------
# Fused forward kernel
# --------------------------------------------------------------------------
def _fused_gnn_kernel(a_ref, xin_ref, win_ref, bin_ref,
                      wres_ref, bres_ref, bgcn_ref,
                      w1_ref, b1_ref, w2_ref, b2_ref,
                      wout_ref, bout_ref,
                      out_ref, xbuf_ref,
                      *, np_, tm, num_layers, a_resident):
    """Grid = (num_layers + 1, num_row_tiles).

    l == 0           : tiled prologue, x0 = relu(x @ W_in + b_in) -> xbuf[0]
    l in 1..L        : residual GraphConv block for layer j = l - 1
                       (reads buffer j%2, writes buffer (j+1)%2)
    l == num_layers  : additionally computes lin_out from the freshly written
                       activation tile.

    xbuf_ref is a (2*Np, Hp) bf16 ping-pong buffer holding the full
    activation across layers (never round-trips to HBM).
    """
    l = pl.program_id(0)
    r = pl.program_id(1)
    row_off = pl.multiple_of(r * tm, tm)

    # ---- tiled input projection (prologue "layer") -------------------------
    @pl.when(l == 0)
    def _prologue():
        x0 = jnp.dot(xin_ref[...], win_ref[...],
                     preferred_element_type=jnp.float32) + bin_ref[...]
        xbuf_ref[pl.ds(row_off, tm), :] = jnp.maximum(x0, 0.0).astype(jnp.bfloat16)

    # ---- residual GraphConv block ------------------------------------------
    @pl.when(l > 0)
    def _layer():
        j = l - 1                       # actual layer index
        cur = j % 2                     # buffer holding layer-j input
        nxt = 1 - cur                   # buffer receiving layer-j output
        read_base = pl.multiple_of(cur * np_, tm)
        write_base = pl.multiple_of(nxt * np_, tm)

        x_full = xbuf_ref[pl.ds(read_base, np_), :]              # (Np, Hp) bf16
        x_tile = xbuf_ref[pl.ds(read_base + row_off, tm), :]     # (TM, Hp) bf16

        # residual branch: x_res = x @ W_res + b_res   (bf16 MXU, f32 acc)
        x_res = jnp.dot(x_tile, wres_ref[0],
                        preferred_element_type=jnp.float32) + bres_ref[0]

        # GraphConv aggregation: h = A_hat_tile @ x + b_gcn
        if a_resident:
            a_tile = a_ref[pl.ds(row_off, tm), :]                # slice resident A
        else:
            a_tile = a_ref[...]                                  # streamed strip
        h = jnp.dot(a_tile, x_full,
                    preferred_element_type=jnp.float32) + bgcn_ref[0]

        # MLP: relu(h @ W1 + b1) @ W2 + b2   (dropout == identity in eval)
        h = jnp.dot(h.astype(jnp.bfloat16), w1_ref[0],
                    preferred_element_type=jnp.float32) + b1_ref[0]
        h = jnp.maximum(h, 0.0)
        h = jnp.dot(h.astype(jnp.bfloat16), w2_ref[0],
                    preferred_element_type=jnp.float32) + b2_ref[0]

        new_x = jnp.maximum(x_res + h, 0.0)
        xbuf_ref[pl.ds(write_base + row_off, tm), :] = new_x.astype(jnp.bfloat16)

    # ---- output projection fused into the last layer ------------------------
    @pl.when(l == num_layers)
    def _epilogue():
        # Layer num_layers-1 just wrote buffer (num_layers % 2) for this tile.
        final_base = (num_layers % 2) * np_
        xt = xbuf_ref[pl.ds(final_base + row_off, tm), :]        # (TM, Hp) bf16
        out_ref[...] = jnp.dot(xt, wout_ref[...],
                               preferred_element_type=jnp.float32) + bout_ref[...]


# --------------------------------------------------------------------------
# Wrapper: padding, stacking, VMEM budgeting, pallas_call
# --------------------------------------------------------------------------
def _round_up(x, m):
    return ((x + m - 1) // m) * m


def _pad2(x, rows, cols):
    r, c = x.shape
    return jnp.pad(x, ((0, rows - r), (0, cols - c)))


def _default_tile_m():
    """TM=256 on 256-wide-MXU parts (v6e/v7x); 128 otherwise (v5e and older)."""
    try:
        kind = jax.devices()[0].device_kind.lower()
    except Exception:
        return 128
    if any(tag in kind for tag in ("v6", "v7", "tpu7")):
        return 256
    return 128


def _vmem_capacity_bytes():
    try:
        return int(pltpu.get_tpu_info().vmem_capacity_bytes)
    except Exception:
        return 64 * MIB  # conservative fallback (v7x); v5e/v6e have 128 MiB


def gnn_res_forward(a_hat, x, params, *, tm=None):
    n, in_size = x.shape
    hid = params["w_in"].shape[1]
    out_size = params["w_out"].shape[1]
    layers = params["layers"]
    num_layers = len(layers)
    assert num_layers >= 1

    if tm is None:
        tm = _default_tile_m()

    # Lane-dense padding: features -> multiples of 128, nodes -> multiple of TM.
    ip = _round_up(in_size, 128)
    hp = _round_up(hid, 128)
    op = _round_up(out_size, 128)
    np_ = _round_up(n, tm)
    num_row_tiles = np_ // tm

    # Padded / packed operands.  Weights & activations bf16 (MXU fast path,
    # f32 accumulation in-kernel); biases stay f32 (added post-accumulation).
    a_p = _pad2(a_hat, np_, np_).astype(jnp.bfloat16)
    x_p = _pad2(x, np_, ip).astype(jnp.bfloat16)
    w_in = _pad2(params["w_in"], ip, hp).astype(jnp.bfloat16)
    b_in = _pad2(params["b_in"], 1, hp)
    w_out = _pad2(params["w_out"], hp, op).astype(jnp.bfloat16)
    b_out = _pad2(params["b_out"], 1, op)

    wres = jnp.stack([_pad2(l["w_res"], hp, hp) for l in layers]).astype(jnp.bfloat16)
    bres = jnp.stack([_pad2(l["b_res"], 1, hp) for l in layers])
    bgcn = jnp.stack([_pad2(l["b_gcn"], 1, hp) for l in layers])
    w1 = jnp.stack([_pad2(l["w1"], hp, hp) for l in layers]).astype(jnp.bfloat16)
    b1 = jnp.stack([_pad2(l["b1"], 1, hp) for l in layers])
    w2 = jnp.stack([_pad2(l["w2"], hp, hp) for l in layers]).astype(jnp.bfloat16)
    b2 = jnp.stack([_pad2(l["b2"], 1, hp) for l in layers])

    # ---- VMEM budget: decide A_hat residency and the scoped limit ----------
    vmem_budget = int(_vmem_capacity_bytes() * 0.85)

    xbuf_bytes = 2 * np_ * hp * 2                              # bf16 ping-pong scratch
    layer_w_set = 3 * hp * hp * 2 + 4 * hp * 4                 # wres/w1/w2 bf16 + 4 f32 biases
    weights_bytes = 2 * layer_w_set                            # double-buffered per-layer stream
    const_bytes = 2 * ((ip * hp + hp * op) * 2 + (hp + op) * 4)  # lin_in / lin_out params
    xin_bytes = 2 * tm * ip * 2                                # prologue input tiles (bf16)
    out_bytes = 2 * tm * op * 4                                # output tiles (f32)
    base_bytes = (xbuf_bytes + weights_bytes + const_bytes + xin_bytes
                  + out_bytes + 2 * MIB)                       # + compiler slack

    a_resident_bytes = 2 * np_ * np_ * 2                       # assume double-buffered
    a_stream_bytes = 2 * tm * np_ * 2
    a_resident = (base_bytes + a_resident_bytes) <= vmem_budget
    a_bytes = a_resident_bytes if a_resident else a_stream_bytes

    vmem_limit = int(min(vmem_budget,
                         max((base_bytes + a_bytes) * 5 // 4, 32 * MIB)))

    # ---- BlockSpecs ----------------------------------------------------------
    if a_resident:
        # Whole normalized adjacency stays in VMEM: A_hat is read from HBM once
        # instead of once per layer (removes (L-1)x of the dominant stream).
        a_spec = pl.BlockSpec((np_, np_), lambda l, r: (0, 0))
    else:
        # Stream (TM x Np) row strips; pin to strip 0 during the prologue so
        # the prologue pass does not waste an A_hat traversal.
        a_spec = pl.BlockSpec((tm, np_), lambda l, r: (jnp.where(l > 0, r, 0), 0))

    # Input features: streamed per row tile during the prologue only; pinned to
    # tile 0 afterwards (so only TM x Ip stays resident, not Np x Ip).
    xin_spec = pl.BlockSpec((tm, ip), lambda l, r: (jnp.where(l == 0, r, 0), 0))

    def const_spec(shape):
        nd = len(shape)
        return pl.BlockSpec(shape, lambda l, r, _nd=nd: (0,) * _nd)

    def layer_spec(shape):
        # Block index follows the layer axis only => each layer's weights are
        # DMA'd once per layer (prologue pre-fetches layer 0's set).
        nd = len(shape)
        return pl.BlockSpec((1,) + shape,
                            lambda l, r, _nd=nd: (jnp.maximum(l - 1, 0),) + (0,) * _nd)

    # Output block index only varies on the last layer => no stale per-layer
    # HBM writeback of the output buffer.
    out_spec = pl.BlockSpec((tm, op),
                            lambda l, r: (jnp.where(l == num_layers, r, 0), 0))

    kernel = functools.partial(_fused_gnn_kernel, np_=np_, tm=tm,
                               num_layers=num_layers, a_resident=a_resident)

    grid_spec = pltpu.PrefetchScalarGridSpec(
        num_scalar_prefetch=0,
        grid=(num_layers + 1, num_row_tiles),   # layer axis (incl. prologue), row tiles
        in_specs=[
            a_spec,                                   # A_hat (bf16)
            xin_spec,                                 # x input tiles (bf16)
            const_spec((ip, hp)), const_spec((1, hp)),  # lin_in
            layer_spec((hp, hp)), layer_spec((1, hp)),  # res layer
            layer_spec((1, hp)),                        # GraphConv bias
            layer_spec((hp, hp)), layer_spec((1, hp)),  # lin1
            layer_spec((hp, hp)), layer_spec((1, hp)),  # lin2
            const_spec((hp, op)), const_spec((1, op)),  # lin_out
        ],
        out_specs=out_spec,
        scratch_shapes=[pltpu.VMEM((2 * np_, hp), jnp.bfloat16)],
    )

    out_p = pl.pallas_call(
        kernel,
        out_shape=jax.ShapeDtypeStruct((np_, op), jnp.float32),
        grid_spec=grid_spec,
        compiler_params=pltpu.CompilerParams(
            # NOTE: both axes MUST stay "arbitrary" (sequential): every row
            # tile reads the FULL previous-layer activation from per-core
            # scratch, and the layer axis carries the ping-pong dependency.
            dimension_semantics=("arbitrary", "arbitrary"),
            vmem_limit_bytes=vmem_limit,
        ),
    )(a_p, x_p, w_in, b_in, wres, bres, bgcn, w1, b1, w2, b2, w_out, b_out)

    # Slice padding away in the wrapper (keeps kernel stores lane-dense).
    return out_p[:n, :out_size]


# --------------------------------------------------------------------------
# Pure-JAX f32 reference (for numerical checking)
# --------------------------------------------------------------------------
def reference_forward(a_hat, x, params):
    h = jnp.maximum(x @ params["w_in"] + params["b_in"], 0.0)
    for lyr in params["layers"]:
        x_res = h @ lyr["w_res"] + lyr["b_res"]
        g = a_hat @ h + lyr["b_gcn"]
        g = jnp.maximum(g @ lyr["w1"] + lyr["b1"], 0.0)
        g = g @ lyr["w2"] + lyr["b2"]
        h = jnp.maximum(x_res + g, 0.0)
    return h @ params["w_out"] + params["b_out"]


# --------------------------------------------------------------------------
# Deterministic parameter construction (mirrors the PyTorch __init__)
# --------------------------------------------------------------------------
def xavier_uniform(key, fan_in, fan_out):
    # Stored pre-transposed as (in, out); Xavier is symmetric in fan_in/fan_out.
    bound = math.sqrt(6.0 / (fan_in + fan_out))
    return jax.random.uniform(key, (fan_in, fan_out), jnp.float32, -bound, bound)


def linear_bias(key, fan_in, fan_out):
    # PyTorch nn.Linear default bias init: U(-1/sqrt(fan_in), 1/sqrt(fan_in)).
    bound = 1.0 / math.sqrt(fan_in)
    return jax.random.uniform(key, (1, fan_out), jnp.float32, -bound, bound)


def make_params(key, in_size, hid_size, num_hid_layers, out_size):
    params = {}
    key, k1, k2 = jax.random.split(key, 3)
    params["w_in"] = xavier_uniform(k1, in_size, hid_size)
    params["b_in"] = linear_bias(k2, in_size, hid_size)
    key, k3, k4 = jax.random.split(key, 3)
    params["w_out"] = xavier_uniform(k3, hid_size, out_size)
    params["b_out"] = linear_bias(k4, hid_size, out_size)

    layer_list = []
    for _ in range(num_hid_layers):
        key, ka, kb, kc, kd, ke, kf = jax.random.split(key, 7)
        layer_list.append({
            "w_res": xavier_uniform(ka, hid_size, hid_size),
            "b_res": linear_bias(kb, hid_size, hid_size),
            "b_gcn": jnp.zeros((1, hid_size), jnp.float32),  # GraphConv bias (zeros init)
            "w1": xavier_uniform(kc, hid_size, hid_size),
            "b1": linear_bias(kd, hid_size, hid_size),
            "w2": xavier_uniform(ke, hid_size, hid_size),
            "b2": linear_bias(kf, hid_size, hid_size),
        })
    params["layers"] = layer_list
    return params


def make_graph(key, n):
    """Dense symmetrically-normalized adjacency A_hat = D^-1/2 (A + I) D^-1/2."""
    adj = (jax.random.uniform(key, (n, n)) < 0.1).astype(jnp.float32)
    adj = jnp.maximum(adj, adj.T)                                 # undirected
    adj = jnp.minimum(adj + jnp.eye(n, dtype=jnp.float32), 1.0)   # self loops
    deg = adj.sum(axis=1)
    dinv = 1.0 / jnp.sqrt(deg)
    return dinv[:, None] * adj * dinv[None, :]


# --------------------------------------------------------------------------
if __name__ == "__main__":
    # Small, module-consistent shapes.
    N = 64           # number of graph nodes
    IN_SIZE = 16
    HID_SIZE = 32
    OUT_SIZE = 8
    NUM_LAYERS = 2

    key = jax.random.PRNGKey(0)
    key, k_x, k_g, k_p = jax.random.split(key, 4)

    x = jax.random.normal(k_x, (N, IN_SIZE), jnp.float32)
    a_hat = make_graph(k_g, N)
    params = make_params(k_p, IN_SIZE, HID_SIZE, NUM_LAYERS, OUT_SIZE)

    out = gnn_res_forward(a_hat, x, params)
    jax.block_until_ready(out)
    assert out.shape == (N, OUT_SIZE), out.shape

    # Numerical check against the f32 reference (bf16 inputs / f32 accumulate).
    ref = reference_forward(a_hat, x, params)
    err = float(jnp.max(jnp.abs(out - ref)))
    scale = float(jnp.max(jnp.abs(ref))) + 1e-6
    assert err <= 1e-2 + 5e-2 * scale, (err, scale)

    print("KERNEL_OK")
</pallas_src>

<mosaic_0001>
module attributes {stable_mosaic.version = 11 : i64} {
  func.func @_fused_gnn_kernel(%arg0: i32, %arg1: i32, %arg2: memref<128x128xbf16, #tpu.memory_space<vmem>>, %arg3: memref<128x128xbf16, #tpu.memory_space<vmem>>, %arg4: memref<128x128xbf16, #tpu.memory_space<vmem>>, %arg5: memref<1x128xf32, #tpu.memory_space<vmem>>, %arg6: memref<1x128x128xbf16, #tpu.memory_space<vmem>>, %arg7: memref<1x1x128xf32, #tpu.memory_space<vmem>>, %arg8: memref<1x1x128xf32, #tpu.memory_space<vmem>>, %arg9: memref<1x128x128xbf16, #tpu.memory_space<vmem>>, %arg10: memref<1x1x128xf32, #tpu.memory_space<vmem>>, %arg11: memref<1x128x128xbf16, #tpu.memory_space<vmem>>, %arg12: memref<1x1x128xf32, #tpu.memory_space<vmem>>, %arg13: memref<128x128xbf16, #tpu.memory_space<vmem>>, %arg14: memref<1x128xf32, #tpu.memory_space<vmem>>, %arg15: memref<128x128xf32, #tpu.memory_space<vmem>>, %arg16: memref<256x128xbf16, #tpu.memory_space<vmem>>) attributes {dimension_semantics = [#tpu.dimension_semantics<arbitrary>, #tpu.dimension_semantics<arbitrary>], iteration_bounds = array<i64: 3, 1>, scalar_prefetch = 0 : i64, scratch_operands = 1 : i64, tpu.core_type = #tpu.core_type<tc>, window_params = [{pipeline_mode = #tpu.pipeline_mode<synchronous>, transform_indices = @transform_0, window_bounds = array<i64: 128, 128>}, {transform_indices = @transform_1, window_bounds = array<i64: 128, 128>}, {pipeline_mode = #tpu.pipeline_mode<synchronous>, transform_indices = @transform_2, window_bounds = array<i64: 128, 128>}, {pipeline_mode = #tpu.pipeline_mode<synchronous>, transform_indices = @transform_3, window_bounds = array<i64: 1, 128>}, {transform_indices = @transform_4, window_bounds = array<i64: 1, 128, 128>}, {transform_indices = @transform_5, window_bounds = array<i64: 1, 1, 128>}, {transform_indices = @transform_6, window_bounds = array<i64: 1, 1, 128>}, {transform_indices = @transform_7, window_bounds = array<i64: 1, 128, 128>}, {transform_indices = @transform_8, window_bounds = array<i64: 1, 1, 128>}, {transform_indices = @transform_9, window_bounds = array<i64: 1, 128, 128>}, {transform_indices = @transform_10, window_bounds = array<i64: 1, 1, 128>}, {pipeline_mode = #tpu.pipeline_mode<synchronous>, transform_indices = @transform_11, window_bounds = array<i64: 128, 128>}, {pipeline_mode = #tpu.pipeline_mode<synchronous>, transform_indices = @transform_12, window_bounds = array<i64: 1, 128>}, {transform_indices = @transform_13, window_bounds = array<i64: 128, 128>}]} {
    %c128_i32 = arith.constant 128 : i32
    %0 = arith.muli %arg1, %c128_i32 : i32
    %1 = tpu.assume_multiple %0, 128 : i32
    %c0_i32 = arith.constant 0 : i32
    %2 = arith.cmpi eq, %arg0, %c0_i32 : i32
    %3 = arith.extui %2 : i1 to i32
    %c0_i32_0 = arith.constant 0 : i32
    %4 = arith.cmpi ne, %3, %c0_i32_0 : i32
    scf.if %4 {
      %c0 = arith.constant 0 : index
      %c0_4 = arith.constant 0 : index
      %11 = vector.load %arg3[%c0, %c0_4] : memref<128x128xbf16, #tpu.memory_space<vmem>>, vector<128x128xbf16>
      %c0_5 = arith.constant 0 : index
      %c0_6 = arith.constant 0 : index
      %12 = vector.load %arg4[%c0_5, %c0_6] : memref<128x128xbf16, #tpu.memory_space<vmem>>, vector<128x128xbf16>
      %cst = arith.constant dense<0.000000e+00> : vector<128x128xf32>
      %13 = tpu.matmul %11, %12, %cst {dimension_numbers = #tpu.dot_dimension_numbers<[1], [0], [0], [1], [0, 0, 1, 1], [], []>} : vector<128x128xbf16>, vector<128x128xbf16>, vector<128x128xf32> -> vector<128x128xf32>
      %c0_7 = arith.constant 0 : index
      %c0_8 = arith.constant 0 : index
      %14 = vector.load %arg5[%c0_7, %c0_8] : memref<1x128xf32, #tpu.memory_space<vmem>>, vector<1x128xf32>
      %15 = vector.broadcast %14 : vector<1x128xf32> to vector<128x128xf32>
      %16 = arith.addf %13, %15 : vector<128x128xf32>
      %cst_9 = arith.constant 0.000000e+00 : f32
      %17 = vector.broadcast %cst_9 : f32 to vector<128x128xf32>
      %18 = arith.maximumf %16, %17 : vector<128x128xf32>
      %19 = arith.truncf %18 : vector<128x128xf32> to vector<128x128xbf16>
      %20 = arith.index_cast %1 : i32 to index
      %c0_10 = arith.constant 0 : index
      %21 = vector.load %arg16[%20, %c0_10] : memref<256x128xbf16, #tpu.memory_space<vmem>>, vector<128x128xbf16>
      tpu.vector_store %arg16[%20, %c0_10], %19 {strides = array<i32>} : memref<256x128xbf16, #tpu.memory_space<vmem>>, vector<128x128xbf16>,
    } else {
    }
    %c0_i32_1 = arith.constant 0 : i32
    %5 = arith.cmpi sgt, %arg0, %c0_i32_1 : i32
    %6 = arith.extui %5 : i1 to i32
    %c0_i32_2 = arith.constant 0 : i32
    %7 = arith.cmpi ne, %6, %c0_i32_2 : i32
    scf.if %7 {
      %c1_i32 = arith.constant 1 : i32
      %11 = arith.subi %arg0, %c1_i32 : i32
      %c2_i32_4 = arith.constant 2 : i32
      %c0_i32_5 = arith.constant 0 : i32
      %12 = arith.cmpi eq, %c2_i32_4, %c0_i32_5 : i32
      %c1_i32_6 = arith.constant 1 : i32
      %13 = arith.select %12, %c1_i32_6, %c2_i32_4 : i32
      %14 = arith.remsi %11, %13 : i32
      %c0_i32_7 = arith.constant 0 : i32
      %15 = arith.cmpi ne, %14, %c0_i32_7 : i32
      %c0_i32_8 = arith.constant 0 : i32
      %16 = arith.cmpi slt, %14, %c0_i32_8 : i32
      %c0_i32_9 = arith.constant 0 : i32
      %17 = arith.cmpi slt, %13, %c0_i32_9 : i32
      %18 = arith.xori %16, %17 : i1
      %19 = arith.andi %18, %15 : i1
      %20 = arith.addi %14, %13 : i32
      %21 = arith.select %19, %20, %14 : i32
      %c1_i32_10 = arith.constant 1 : i32
      %22 = arith.subi %c1_i32_10, %21 : i32
      %c128_i32_11 = arith.constant 128 : i32
      %23 = arith.muli %21, %c128_i32_11 : i32
      %24 = tpu.assume_multiple %23, 128 : i32
      %c128_i32_12 = arith.constant 128 : i32
      %25 = arith.muli %22, %c128_i32_12 : i32
      %26 = tpu.assume_multiple %25, 128 : i32
      %27 = arith.index_cast %24 : i32 to index
      %c0 = arith.constant 0 : index
      %28 = vector.load %arg16[%27, %c0] : memref<256x128xbf16, #tpu.memory_space<vmem>>, vector<128x128xbf16>
      %29 = arith.addi %24, %1 : i32
      %30 = arith.index_cast %29 : i32 to index
      %c0_13 = arith.constant 0 : index
      %31 = vector.load %arg16[%30, %c0_13] : memref<256x128xbf16, #tpu.memory_space<vmem>>, vector<128x128xbf16>
      %c0_14 = arith.constant 0 : index
      %c0_15 = arith.constant 0 : index
      %c0_16 = arith.constant 0 : index
      %32 = vector.load %arg6[%c0_14, %c0_15, %c0_16] : memref<1x128x128xbf16, #tpu.memory_space<vmem>>, vector<1x128x128xbf16>
      %33 = vector.shape_cast %32 : vector<1x128x128xbf16> to vector<128x128xbf16>
      %cst = arith.constant dense<0.000000e+00> : vector<128x128xf32>
      %34 = tpu.matmul %31, %33, %cst {dimension_numbers = #tpu.dot_dimension_numbers<[1], [0], [0], [1], [0, 0, 1, 1], [], []>} : vector<128x128xbf16>, vector<128x128xbf16>, vector<128x128xf32> -> vector<128x128xf32>
      %c0_17 = arith.constant 0 : index
      %c0_18 = arith.constant 0 : index
      %c0_19 = arith.constant 0 : index
      %35 = vector.load %arg7[%c0_17, %c0_18, %c0_19] : memref<1x1x128xf32, #tpu.memory_space<vmem>>, vector<1x1x128xf32>
      %36 = vector.shape_cast %35 : vector<1x1x128xf32> to vector<1x128xf32>
      %37 = vector.broadcast %36 : vector<1x128xf32> to vector<128x128xf32>
      %38 = arith.addf %34, %37 : vector<128x128xf32>
      %39 = arith.index_cast %1 : i32 to index
      %c0_20 = arith.constant 0 : index
      %40 = vector.load %arg2[%39, %c0_20] : memref<128x128xbf16, #tpu.memory_space<vmem>>, vector<128x128xbf16>
      %cst_21 = arith.constant dense<0.000000e+00> : vector<128x128xf32>
      %41 = tpu.matmul %40, %28, %cst_21 {dimension_numbers = #tpu.dot_dimension_numbers<[1], [0], [0], [1], [0, 0, 1, 1], [], []>} : vector<128x128xbf16>, vector<128x128xbf16>, vector<128x128xf32> -> vector<128x128xf32>
      %c0_22 = arith.constant 0 : index
      %c0_23 = arith.constant 0 : index
      %c0_24 = arith.constant 0 : index
      %42 = vector.load %arg8[%c0_22, %c0_23, %c0_24] : memref<1x1x128xf32, #tpu.memory_space<vmem>>, vector<1x1x128xf32>
      %43 = vector.shape_cast %42 : vector<1x1x128xf32> to vector<1x128xf32>
      %44 = vector.broadcast %43 : vector<1x128xf32> to vector<128x128xf32>
      %45 = arith.addf %41, %44 : vector<128x128xf32>
      %46 = arith.truncf %45 : vector<128x128xf32> to vector<128x128xbf16>
      %c0_25 = arith.constant 0 : index
      %c0_26 = arith.constant 0 : index
      %c0_27 = arith.constant 0 : index
      %47 = vector.load %arg9[%c0_25, %c0_26, %c0_27] : memref<1x128x128xbf16, #tpu.memory_space<vmem>>, vector<1x128x128xbf16>
      %48 = vector.shape_cast %47 : vector<1x128x128xbf16> to vector<128x128xbf16>
      %cst_28 = arith.constant dense<0.000000e+00> : vector<128x128xf32>
      %49 = tpu.matmul %46, %48, %cst_28 {dimension_numbers = #tpu.dot_dimension_numbers<[1], [0], [0], [1], [0, 0, 1, 1], [], []>} : vector<128x128xbf16>, vector<128x128xbf16>, vector<128x128xf32> -> vector<128x128xf32>
      %c0_29 = arith.constant 0 : index
      %c0_30 = arith.constant 0 : index
      %c0_31 = arith.constant 0 : index
      %50 = vector.load %arg10[%c0_29, %c0_30, %c0_31] : memref<1x1x128xf32, #tpu.memory_space<vmem>>, vector<1x1x128xf32>
      %51 = vector.shape_cast %50 : vector<1x1x128xf32> to vector<1x128xf32>
      %52 = vector.broadcast %51 : vector<1x128xf32> to vector<128x128xf32>
      %53 = arith.addf %49, %52 : vector<128x128xf32>
      %cst_32 = arith.constant 0.000000e+00 : f32
      %54 = vector.broadcast %cst_32 : f32 to vector<128x128xf32>
      %55 = arith.maximumf %53, %54 : vector<128x128xf32>
      %56 = arith.truncf %55 : vector<128x128xf32> to vector<128x128xbf16>
      %c0_33 = arith.constant 0 : index
      %c0_34 = arith.constant 0 : index
      %c0_35 = arith.constant 0 : index
      %57 = vector.load %arg11[%c0_33, %c0_34, %c0_35] : memref<1x128x128xbf16, #tpu.memory_space<vmem>>, vector<1x128x128xbf16>
      %58 = vector.shape_cast %57 : vector<1x128x128xbf16> to vector<128x128xbf16>
      %cst_36 = arith.constant dense<0.000000e+00> : vector<128x128xf32>
      %59 = tpu.matmul %56, %58, %cst_36 {dimension_numbers = #tpu.dot_dimension_numbers<[1], [0], [0], [1], [0, 0, 1, 1], [], []>} : vector<128x128xbf16>, vector<128x128xbf16>, vector<128x128xf32> -> vector<128x128xf32>
      %c0_37 = arith.constant 0 : index
      %c0_38 = arith.constant 0 : index
      %c0_39 = arith.constant 0 : index
      %60 = vector.load %arg12[%c0_37, %c0_38, %c0_39] : memref<1x1x128xf32, #tpu.memory_space<vmem>>, vector<1x1x128xf32>
      %61 = vector.shape_cast %60 : vector<1x1x128xf32> to vector<1x128xf32>
      %62 = vector.broadcast %61 : vector<1x128xf32> to vector<128x128xf32>
      %63 = arith.addf %59, %62 : vector<128x128xf32>
      %64 = arith.addf %38, %63 : vector<128x128xf32>
      %cst_40 = arith.constant 0.000000e+00 : f32
      %65 = vector.broadcast %cst_40 : f32 to vector<128x128xf32>
      %66 = arith.maximumf %64, %65 : vector<128x128xf32>
      %67 = arith.truncf %66 : vector<128x128xf32> to vector<128x128xbf16>
      %68 = arith.addi %26, %1 : i32
      %69 = arith.index_cast %68 : i32 to index
      %c0_41 = arith.constant 0 : index
      %70 = vector.load %arg16[%69, %c0_41] : memref<256x128xbf16, #tpu.memory_space<vmem>>, vector<128x128xbf16>
      tpu.vector_store %arg16[%69, %c0_41], %67 {strides = array<i32>} : memref<256x128xbf16, #tpu.memory_space<vmem>>, vector<128x128xbf16>,
    } else {
    }
    %c2_i32 = arith.constant 2 : i32
    %8 = arith.cmpi eq, %arg0, %c2_i32 : i32
    %9 = arith.extui %8 : i1 to i32
    %c0_i32_3 = arith.constant 0 : i32
    %10 = arith.cmpi ne, %9, %c0_i32_3 : i32
    scf.if %10 {
      %c0_i32_4 = arith.constant 0 : i32
      %11 = arith.addi %c0_i32_4, %1 : i32
      %12 = arith.index_cast %11 : i32 to index
      %c0 = arith.constant 0 : index
      %13 = vector.load %arg16[%12, %c0] : memref<256x128xbf16, #tpu.memory_space<vmem>>, vector<128x128xbf16>
      %c0_5 = arith.constant 0 : index
      %c0_6 = arith.constant 0 : index
      %14 = vector.load %arg13[%c0_5, %c0_6] : memref<128x128xbf16, #tpu.memory_space<vmem>>, vector<128x128xbf16>
      %cst = arith.constant dense<0.000000e+00> : vector<128x128xf32>
      %15 = tpu.matmul %13, %14, %cst {dimension_numbers = #tpu.dot_dimension_numbers<[1], [0], [0], [1], [0, 0, 1, 1], [], []>} : vector<128x128xbf16>, vector<128x128xbf16>, vector<128x128xf32> -> vector<128x128xf32>
      %c0_7 = arith.constant 0 : index
      %c0_8 = arith.constant 0 : index
      %16 = vector.load %arg14[%c0_7, %c0_8] : memref<1x128xf32, #tpu.memory_space<vmem>>, vector<1x128xf32>
      %17 = vector.broadcast %16 : vector<1x128xf32> to vector<128x128xf32>
      %18 = arith.addf %15, %17 : vector<128x128xf32>
      %c0_9 = arith.constant 0 : index
      %c0_10 = arith.constant 0 : index
      %19 = vector.load %arg15[%c0_9, %c0_10] : memref<128x128xf32, #tpu.memory_space<vmem>>, vector<128x128xf32>
      tpu.vector_store %arg15[%c0_9, %c0_10], %18 {strides = array<i32>} : memref<128x128xf32, #tpu.memory_space<vmem>>, vector<128x128xf32>,
    } else {
    }
    return
  }
  func.func @transform_0(%arg0: i32, %arg1: i32) -> (i32, i32) {
    %c0_i32 = arith.constant 0 : i32
    %c0_i32_0 = arith.constant 0 : i32
    %c0_i32_1 = arith.constant 0 : i32
    return %c0_i32, %c0_i32_0 : i32, i32
  }
  func.func @transform_1(%arg0: i32, %arg1: i32) -> (i32, i32) {
    %c0_i32 = arith.constant 0 : i32
    %0 = arith.cmpi eq, %arg0, %c0_i32 : i32
    %c0_i32_0 = arith.constant 0 : i32
    %1 = arith.select %0, %arg1, %c0_i32_0 : i32
    %c0_i32_1 = arith.constant 0 : i32
    %c0_i32_2 = arith.constant 0 : i32
    return %1, %c0_i32_1 : i32, i32
  }
  func.func @transform_2(%arg0: i32, %arg1: i32) -> (i32, i32) {
    %c0_i32 = arith.constant 0 : i32
    %c0_i32_0 = arith.constant 0 : i32
    %c0_i32_1 = arith.constant 0 : i32
    return %c0_i32, %c0_i32_0 : i32, i32
  }
  func.func @transform_3(%arg0: i32, %arg1: i32) -> (i32, i32) {
    %c0_i32 = arith.constant 0 : i32
    %c0_i32_0 = arith.constant 0 : i32
    %c0_i32_1 = arith.constant 0 : i32
    return %c0_i32, %c0_i32_0 : i32, i32
  }
  func.func @transform_4(%arg0: i32, %arg1: i32) -> (i32, i32, i32) {
    %c1_i32 = arith.constant 1 : i32
    %0 = arith.subi %arg0, %c1_i32 : i32
    %c0_i32 = arith.constant 0 : i32
    %1 = arith.maxsi %0, %c0_i32 : i32
    %c0_i32_0 = arith.constant 0 : i32
    %c0_i32_1 = arith.constant 0 : i32
    %c0_i32_2 = arith.constant 0 : i32
    return %1, %c0_i32_0, %c0_i32_1 : i32, i32, i32
  }
  func.func @transform_5(%arg0: i32, %arg1: i32) -> (i32, i32, i32) {
    %c1_i32 = arith.constant 1 : i32
    %0 = arith.subi %arg0, %c1_i32 : i32
    %c0_i32 = arith.constant 0 : i32
    %1 = arith.maxsi %0, %c0_i32 : i32
    %c0_i32_0 = arith.constant 0 : i32
    %c0_i32_1 = arith.constant 0 : i32
    %c0_i32_2 = arith.constant 0 : i32
    return %1, %c0_i32_0, %c0_i32_1 : i32, i32, i32
  }
  func.func @transform_6(%arg0: i32, %arg1: i32) -> (i32, i32, i32) {
    %c1_i32 = arith.constant 1 : i32
    %0 = arith.subi %arg0, %c1_i32 : i32
    %c0_i32 = arith.constant 0 : i32
    %1 = arith.maxsi %0, %c0_i32 : i32
    %c0_i32_0 = arith.constant 0 : i32
    %c0_i32_1 = arith.constant 0 : i32
    %c0_i32_2 = arith.constant 0 : i32
    return %1, %c0_i32_0, %c0_i32_1 : i32, i32, i32
  }
  func.func @transform_7(%arg0: i32, %arg1: i32) -> (i32, i32, i32) {
    %c1_i32 = arith.constant 1 : i32
    %0 = arith.subi %arg0, %c1_i32 : i32
    %c0_i32 = arith.constant 0 : i32
    %1 = arith.maxsi %0, %c0_i32 : i32
    %c0_i32_0 = arith.constant 0 : i32
    %c0_i32_1 = arith.constant 0 : i32
    %c0_i32_2 = arith.constant 0 : i32
    return %1, %c0_i32_0, %c0_i32_1 : i32, i32, i32
  }
  func.func @transform_8(%arg0: i32, %arg1: i32) -> (i32, i32, i32) {
    %c1_i32 = arith.constant 1 : i32
    %0 = arith.subi %arg0, %c1_i32 : i32
    %c0_i32 = arith.constant 0 : i32
    %1 = arith.maxsi %0, %c0_i32 : i32
    %c0_i32_0 = arith.constant 0 : i32
    %c0_i32_1 = arith.constant 0 : i32
    %c0_i32_2 = arith.constant 0 : i32
    return %1, %c0_i32_0, %c0_i32_1 : i32, i32, i32
  }
  func.func @transform_9(%arg0: i32, %arg1: i32) -> (i32, i32, i32) {
    %c1_i32 = arith.constant 1 : i32
    %0 = arith.subi %arg0, %c1_i32 : i32
    %c0_i32 = arith.constant 0 : i32
    %1 = arith.maxsi %0, %c0_i32 : i32
    %c0_i32_0 = arith.constant 0 : i32
    %c0_i32_1 = arith.constant 0 : i32
    %c0_i32_2 = arith.constant 0 : i32
    return %1, %c0_i32_0, %c0_i32_1 : i32, i32, i32
  }
  func.func @transform_10(%arg0: i32, %arg1: i32) -> (i32, i32, i32) {
    %c1_i32 = arith.constant 1 : i32
    %0 = arith.subi %arg0, %c1_i32 : i32
    %c0_i32 = arith.constant 0 : i32
    %1 = arith.maxsi %0, %c0_i32 : i32
    %c0_i32_0 = arith.constant 0 : i32
    %c0_i32_1 = arith.constant 0 : i32
    %c0_i32_2 = arith.constant 0 : i32
    return %1, %c0_i32_0, %c0_i32_1 : i32, i32, i32
  }
  func.func @transform_11(%arg0: i32, %arg1: i32) -> (i32, i32) {
    %c0_i32 = arith.constant 0 : i32
    %c0_i32_0 = arith.constant 0 : i32
    %c0_i32_1 = arith.constant 0 : i32
    return %c0_i32, %c0_i32_0 : i32, i32
  }
  func.func @transform_12(%arg0: i32, %arg1: i32) -> (i32, i32) {
    %c0_i32 = arith.constant 0 : i32
    %c0_i32_0 = arith.constant 0 : i32
    %c0_i32_1 = arith.constant 0 : i32
    return %c0_i32, %c0_i32_0 : i32, i32
  }
  func.func @transform_13(%arg0: i32, %arg1: i32) -> (i32, i32) {
    %c2_i32 = arith.constant 2 : i32
    %0 = arith.cmpi eq, %arg0, %c2_i32 : i32
    %c0_i32 = arith.constant 0 : i32
    %1 = arith.select %0, %arg1, %c0_i32 : i32
    %c0_i32_0 = arith.constant 0 : i32
    %c0_i32_1 = arith.constant 0 : i32
    return %1, %c0_i32_0 : i32, i32
  }
}

</mosaic_0001>

<llo_original>
// kernel: tpu_custom_call.1
$region0: #{tpu_custom_call.1}
  #allocation0 [shape = 'u32[]', space=smem, size = 0x4, offset = 0x4, fixed_abs, tag = 'smem constant byte address 0x4 - core index']
  #allocation1 [shape = 'u32[144,128]{1,0:T(1,128)}', space=vmem, size = 0x12000, scoped, tag = 'internal scratch']
  #allocation2 [shape = 'bf16[256,128]{1,0:T(16,128)(2,1)}', space=vmem, size = 0x10000, scoped, tag = 'scratch operand']
  %s0 = inlined_call_operand.hbm [shape: bf16[128,128], index: 0, kind: input, shape index: {}]
  %s1 = inlined_call_operand.hbm [shape: bf16[128,128], index: 1, kind: input, shape index: {}]
  %s2 = inlined_call_operand.hbm [shape: bf16[128,128], index: 2, kind: input, shape index: {}]
  %s3 = inlined_call_operand.vmem [shape: f32[1,128], index: 3, kind: input, shape index: {}]
  %s4 = inlined_call_operand.hbm [shape: bf16[2,128,128], index: 4, kind: input, shape index: {}]
  %s5 = inlined_call_operand.vmem [shape: f32[2,1,128], index: 5, kind: input, shape index: {}]
  %s6 = inlined_call_operand.vmem [shape: f32[2,1,128], index: 6, kind: input, shape index: {}]
  %s7 = inlined_call_operand.hbm [shape: bf16[2,128,128], index: 7, kind: input, shape index: {}]
  %s8 = inlined_call_operand.vmem [shape: f32[2,1,128], index: 8, kind: input, shape index: {}]
  %s9 = inlined_call_operand.hbm [shape: bf16[2,128,128], index: 9, kind: input, shape index: {}]
  %s10 = inlined_call_operand.vmem [shape: f32[2,1,128], index: 10, kind: input, shape index: {}]
  %s11 = inlined_call_operand.hbm [shape: bf16[128,128], index: 11, kind: input, shape index: {}]
  %s12 = inlined_call_operand.vmem [shape: f32[1,128], index: 12, kind: input, shape index: {}]
  %s13 = inlined_call_operand.hbm [shape: f32[128,128], index: 13, kind: output, shape index: {}]
  %s14 = sld [smem:[#allocation0]]
  $region125: #{tpu_custom_call.1} parent=0
    _
  %s16 = ssub.s32 1, %s14
  %s17 = scalar_select 0, %s16, %s14
  $region1: #{tpu_custom_call.1} parent=0
    #allocation3 [shape = 'u8[32768]{0}', space=vmem, size = 0x8000, scoped, tag = 'input window, operand 0, single buffered']
    #allocation4 [shape = 's32[2]{0}', space=sflag, size = 0x8, scoped, tag = 'scoped memory for tpu_custom_call.1']
    #allocation5 [shape = 's32[2]{0}', space=sflag, size = 0x8, scoped, tag = 'scoped memory for tpu_custom_call.1']
    #allocation6 [shape = 'u8[65536]{0}', space=vmem, size = 0x10000, scoped, tag = 'input window, operand 1']
    #allocation7 [shape = 's32[2]{0}', space=sflag, size = 0x8, scoped, tag = 'scoped memory for tpu_custom_call.1']
    #allocation8 [shape = 'u8[32768]{0}', space=vmem, size = 0x8000, scoped, tag = 'input window, operand 2, single buffered']
    #allocation9 [shape = 'u8[65536]{0}', space=vmem, size = 0x10000, scoped, tag = 'input window, operand 4']
    #allocation10 [shape = 's32[2]{0}', space=sflag, size = 0x8, scoped, tag = 'scoped memory for tpu_custom_call.1']
    #allocation11 [shape = 'u8[65536]{0}', space=vmem, size = 0x10000, scoped, tag = 'input window, operand 7']
    #allocation12 [shape = 'u8[65536]{0}', space=vmem, size = 0x10000, scoped, tag = 'input window, operand 9']
    #allocation13 [shape = 's32[2]{0}', space=sflag, size = 0x8, scoped, tag = 'scoped memory for tpu_custom_call.1']
    #allocation14 [shape = 'u8[32768]{0}', space=vmem, size = 0x8000, scoped, tag = 'input window, operand 11, single buffered']
    #allocation15 [shape = 'u8[131072]{0}', space=vmem, size = 0x20000, scoped, tag = 'output window, operand 0']
    %18 = vsyncpa [#allocation4], 0
    %19 = vsyncpa [#allocation7], 0
    %s20 = scalar_lea.sflag [#allocation7], 1
    %21 = vsyncpa %s20, 0
    %22 = vsyncpa [#allocation10], 0
    %s23 = scalar_lea.sflag [#allocation10], 1
    %24 = vsyncpa %s23, 0
    %25 = vsyncpa [#allocation13], 0
    %s26 = scalar_lea.sflag [#allocation13], 1
    %27 = vsyncpa %s26, 0
    %28 = vsyncpa [#allocation5], 0
    %s29 = scalar_lea.sflag [#allocation5], 1
    %30 = vsyncpa %s29, 0
    loop: start=0, step=1, limit=5
    $region2: #{tpu_custom_call.1} parent=1 // loop_pre_header
      _
    $region3: #{tpu_custom_call.1} parent=1 // loop_header
      %s32 = sphi 0, %s36
      %p33 = scmp.ge.s32.totalorder %s32, 5
      %s39 = sphi 0, %s51
      %s40 = sphi 0, %s47
      %s41 = sphi 0, %s39
      %s42 = sphi 0, %s40
      %s43 = sphi 0, %s41
      %s44 = sphi 0, %s42
      %s52 = sphi 0, %s52
      %s54 = sphi 0, %s52
      %s55 = sphi 0, %s54
      %s69 = sphi 0, %s55
      %s79 = sphi 0, %s81
      %s82 = sphi 0, %s79
      %s83 = sphi 0, %s82
      %s99 = sphi 0, %s83
      %s103 = sphi 0, %s103
      %s105 = sphi 0, %s103
      %s106 = sphi 0, %s105
      %s120 = sphi 0, %s106
      %s124 = sphi 0, %s124
      %s126 = sphi 0, %s124
      %s127 = sphi 0, %s126
      %s141 = sphi 0, %s127
      %s153 = sphi 0, %s155
      %s156 = sphi 0, %s153
      %s157 = sphi 0, %s156
      %s173 = sphi 0, %s157
      %s185 = sphi 0, %s187
      %s188 = sphi 0, %s185
      %s189 = sphi 0, %s188
      %s205 = sphi 0, %s189
      %s217 = sphi 0, %s219
      %s220 = sphi 0, %s217
      %s221 = sphi 0, %s220
      %s237 = sphi 0, %s221
      %s249 = sphi 0, %s251
      %s252 = sphi 0, %s249
      %s253 = sphi 0, %s252
      %s269 = sphi 0, %s253
      %s281 = sphi 0, %s283
      %s284 = sphi 0, %s281
      %s285 = sphi 0, %s284
      %s301 = sphi 0, %s285
      %s313 = sphi 0, %s315
      %s316 = sphi 0, %s313
      %s317 = sphi 0, %s316
      %s333 = sphi 0, %s317
      %s345 = sphi 0, %s347
      %s348 = sphi 0, %s345
      %s349 = sphi 0, %s348
      %s365 = sphi 0, %s349
      %s369 = sphi 0, %s369
      %s371 = sphi 0, %s369
      %s372 = sphi 0, %s371
      %s386 = sphi 0, %s372
      %s390 = sphi 0, %s390
      %s392 = sphi 0, %s390
      %s393 = sphi 0, %s392
      %s407 = sphi 0, %s393
      %s417 = sphi 0, %s419
      %s420 = sphi 0, %s417
      %s421 = sphi 0, %s420
      %s437 = sphi 0, %s421
    $region4: #{tpu_custom_call.1} parent=1 // loop_header_branch
      %35 = sbr.rel (%p33) target = $region8
    $region5: #{tpu_custom_call.1} parent=1 // loop_body
      %s37 = ssub.s32 %s32, 1
      %s38 = ssub.s32 %s32, 2
      %s45 = sadd.s32 1, %s40
      %p46 = scmp.ge.s32.totalorder %s45, 1
      %s47 = scalar_select %p46, 0, %s45
      %s48 = sadd.s32 1, %s39
      %s49 = scalar_select %p46, %s48, %s39
      %p50 = scmp.ge.s32.totalorder %s49, 3
      %s51 = scalar_select %p50, 0, %s49
      %s53 = sadd.s32 %s52, 1
      %p56 = scmp.eq.s32.totalorder %s32, 2
      %p57 = scmp.ne.s32.totalorder %s52, %s54
      %p58 = scmp.eq.s32.totalorder %s32, 0
      %p59 = por %p57, %p58
      %p60 = scmp.ne.s32.totalorder %s52, %s54
      %p61 = scmp.eq.s32.totalorder %s37, 2
      %p62 = por %p60, %p61
      %p63 = scmp.ne.s32.totalorder %s54, %s55
      %p64 = scmp.eq.s32.totalorder %s37, 0
      %p65 = por %p63, %p64
      %p66 = scmp.ne.s32.totalorder %s54, %s55
      %p67 = scmp.eq.s32.totalorder %s38, 2
      %p68 = por %p66, %p67
      %p70 = scmp.ne.s32.totalorder %s55, %s69
      %p71 = scmp.eq.s32.totalorder %s38, 0
      %p72 = por %p70, %p71
      %p73 = scmp.eq.s32.totalorder %s39, 0
      %s74 = scalar_select %p73, %s40, 0
      %p75 = scmp.eq.s32.totalorder %s51, 0
      %s76 = scalar_select %p75, %s47, 0
      %s77 = ssub.s32 %s74, %s76
      %p78 = scmp.eq.s32.totalorder %s77, 0
      %s80 = sadd.s32 %s79, 1
      %s81 = scalar_select %p78, %s79, %s80
      %p84 = pneg %p78
      %p85 = scmp.eq.s32.totalorder %s32, 2
      %p86 = por %p84, %p85
      %p87 = scmp.ne.s32.totalorder %s79, %s82
      %p88 = scmp.eq.s32.totalorder %s32, 0
      %p89 = por %p87, %p88
      %p90 = scmp.ne.s32.totalorder %s79, %s82
      %p91 = scmp.eq.s32.totalorder %s37, 2
      %p92 = por %p90, %p91
      %p93 = scmp.ne.s32.totalorder %s82, %s83
      %p94 = scmp.eq.s32.totalorder %s37, 0
      %p95 = por %p93, %p94
      %p96 = scmp.ne.s32.totalorder %s82, %s83
      %p97 = scmp.eq.s32.totalorder %s38, 2
      %p98 = por %p96, %p97
      %p100 = scmp.ne.s32.totalorder %s83, %s99
      %p101 = scmp.eq.s32.totalorder %s38, 0
      %p102 = por %p100, %p101
      %s104 = sadd.s32 %s103, 1
      %p107 = scmp.eq.s32.totalorder %s32, 2
      %p108 = scmp.ne.s32.totalorder %s103, %s105
      %p109 = scmp.eq.s32.totalorder %s32, 0
      %p110 = por %p108, %p109
      %p111 = scmp.ne.s32.totalorder %s103, %s105
      %p112 = scmp.eq.s32.totalorder %s37, 2
      %p113 = por %p111, %p112
      %p114 = scmp.ne.s32.totalorder %s105, %s106
      %p115 = scmp.eq.s32.totalorder %s37, 0
      %p116 = por %p114, %p115
      %p117 = scmp.ne.s32.totalorder %s105, %s106
      %p118 = scmp.eq.s32.totalorder %s38, 2
      %p119 = por %p117, %p118
      %p121 = scmp.ne.s32.totalorder %s106, %s120
      %p122 = scmp.eq.s32.totalorder %s38, 0
      %p123 = por %p121, %p122
      %s125 = sadd.s32 %s124, 1
      %p128 = scmp.eq.s32.totalorder %s32, 2
      %p129 = scmp.ne.s32.totalorder %s124, %s126
      %p130 = scmp.eq.s32.totalorder %s32, 0
      %p131 = por %p129, %p130
      %p132 = scmp.ne.s32.totalorder %s124, %s126
      %p133 = scmp.eq.s32.totalorder %s37, 2
      %p134 = por %p132, %p133
      %p135 = scmp.ne.s32.totalorder %s126, %s127
      %p136 = scmp.eq.s32.totalorder %s37, 0
      %p137 = por %p135, %p136
      %p138 = scmp.ne.s32.totalorder %s126, %s127
      %p139 = scmp.eq.s32.totalorder %s38, 2
      %p140 = por %p138, %p139
      %p142 = scmp.ne.s32.totalorder %s127, %s141
      %p143 = scmp.eq.s32.totalorder %s38, 0
      %p144 = por %p142, %p143
      %s145 = ssub.s32 %s39, 1
      %p146 = scmp.gt.s32.totalorder %s145, 0
      %s147 = scalar_select %p146, %s145, 0
      %s148 = ssub.s32 %s51, 1
      %p149 = scmp.gt.s32.totalorder %s148, 0
      %s150 = scalar_select %p149, %s148, 0
      %s151 = ssub.s32 %s147, %s150
      %p152 = scmp.eq.s32.totalorder %s151, 0
      %s154 = sadd.s32 %s153, 1
      %s155 = scalar_select %p152, %s153, %s154
      %p158 = pneg %p152
      %p159 = scmp.eq.s32.totalorder %s32, 2
      %p160 = por %p158, %p159
      %p161 = scmp.ne.s32.totalorder %s153, %s156
      %p162 = scmp.eq.s32.totalorder %s32, 0
      %p163 = por %p161, %p162
      %p164 = scmp.ne.s32.totalorder %s153, %s156
      %p165 = scmp.eq.s32.totalorder %s37, 2
      %p166 = por %p164, %p165
      %p167 = scmp.ne.s32.totalorder %s156, %s157
      %p168 = scmp.eq.s32.totalorder %s37, 0
      %p169 = por %p167, %p168
      %p170 = scmp.ne.s32.totalorder %s156, %s157
      %p171 = scmp.eq.s32.totalorder %s38, 2
      %p172 = por %p170, %p171
      %p174 = scmp.ne.s32.totalorder %s157, %s173
      %p175 = scmp.eq.s32.totalorder %s38, 0
      %p176 = por %p174, %p175
      %s177 = ssub.s32 %s39, 1
      %p178 = scmp.gt.s32.totalorder %s177, 0
      %s179 = scalar_select %p178, %s177, 0
      %s180 = ssub.s32 %s51, 1
      %p181 = scmp.gt.s32.totalorder %s180, 0
      %s182 = scalar_select %p181, %s180, 0
      %s183 = ssub.s32 %s179, %s182
      %p184 = scmp.eq.s32.totalorder %s183, 0
      %s186 = sadd.s32 %s185, 1
      %s187 = scalar_select %p184, %s185, %s186
      %p190 = pneg %p184
      %p191 = scmp.eq.s32.totalorder %s32, 2
      %p192 = por %p190, %p191
      %p193 = scmp.ne.s32.totalorder %s185, %s188
      %p194 = scmp.eq.s32.totalorder %s32, 0
      %p195 = por %p193, %p194
      %p196 = scmp.ne.s32.totalorder %s185, %s188
      %p197 = scmp.eq.s32.totalorder %s37, 2
      %p198 = por %p196, %p197
      %p199 = scmp.ne.s32.totalorder %s188, %s189
      %p200 = scmp.eq.s32.totalorder %s37, 0
      %p201 = por %p199, %p200
      %p202 = scmp.ne.s32.totalorder %s188, %s189
      %p203 = scmp.eq.s32.totalorder %s38, 2
      %p204 = por %p202, %p203
      %p206 = scmp.ne.s32.totalorder %s189, %s205
      %p207 = scmp.eq.s32.totalorder %s38, 0
      %p208 = por %p206, %p207
      %s209 = ssub.s32 %s39, 1
      %p210 = scmp.gt.s32.totalorder %s209, 0
      %s211 = scalar_select %p210, %s209, 0
      %s212 = ssub.s32 %s51, 1
      %p213 = scmp.gt.s32.totalorder %s212, 0
      %s214 = scalar_select %p213, %s212, 0
      %s215 = ssub.s32 %s211, %s214
      %p216 = scmp.eq.s32.totalorder %s215, 0
      %s218 = sadd.s32 %s217, 1
      %s219 = scalar_select %p216, %s217, %s218
      %p222 = pneg %p216
      %p223 = scmp.eq.s32.totalorder %s32, 2
      %p224 = por %p222, %p223
      %p225 = scmp.ne.s32.totalorder %s217, %s220
      %p226 = scmp.eq.s32.totalorder %s32, 0
      %p227 = por %p225, %p226
      %p228 = scmp.ne.s32.totalorder %s217, %s220
      %p229 = scmp.eq.s32.totalorder %s37, 2
      %p230 = por %p228, %p229
      %p231 = scmp.ne.s32.totalorder %s220, %s221
      %p232 = scmp.eq.s32.totalorder %s37, 0
      %p233 = por %p231, %p232
      %p234 = scmp.ne.s32.totalorder %s220, %s221
      %p235 = scmp.eq.s32.totalorder %s38, 2
      %p236 = por %p234, %p235
      %p238 = scmp.ne.s32.totalorder %s221, %s237
      %p239 = scmp.eq.s32.totalorder %s38, 0
      %p240 = por %p238, %p239
      %s241 = ssub.s32 %s39, 1
      %p242 = scmp.gt.s32.totalorder %s241, 0
      %s243 = scalar_select %p242, %s241, 0
      %s244 = ssub.s32 %s51, 1
      %p245 = scmp.gt.s32.totalorder %s244, 0
      %s246 = scalar_select %p245, %s244, 0
      %s247 = ssub.s32 %s243, %s246
      %p248 = scmp.eq.s32.totalorder %s247, 0
      %s250 = sadd.s32 %s249, 1
      %s251 = scalar_select %p248, %s249, %s250
      %p254 = pneg %p248
      %p255 = scmp.eq.s32.totalorder %s32, 2
      %p256 = por %p254, %p255
      %p257 = scmp.ne.s32.totalorder %s249, %s252
      %p258 = scmp.eq.s32.totalorder %s32, 0
      %p259 = por %p257, %p258
      %p260 = scmp.ne.s32.totalorder %s249, %s252
      %p261 = scmp.eq.s32.totalorder %s37, 2
      %p262 = por %p260, %p261
      %p263 = scmp.ne.s32.totalorder %s252, %s253
      %p264 = scmp.eq.s32.totalorder %s37, 0
      %p265 = por %p263, %p264
      %p266 = scmp.ne.s32.totalorder %s252, %s253
      %p267 = scmp.eq.s32.totalorder %s38, 2
      %p268 = por %p266, %p267
      %p270 = scmp.ne.s32.totalorder %s253, %s269
      %p271 = scmp.eq.s32.totalorder %s38, 0
      %p272 = por %p270, %p271
      %s273 = ssub.s32 %s39, 1
      %p274 = scmp.gt.s32.totalorder %s273, 0
      %s275 = scalar_select %p274, %s273, 0
      %s276 = ssub.s32 %s51, 1
      %p277 = scmp.gt.s32.totalorder %s276, 0
      %s278 = scalar_select %p277, %s276, 0
      %s279 = ssub.s32 %s275, %s278
      %p280 = scmp.eq.s32.totalorder %s279, 0
      %s282 = sadd.s32 %s281, 1
      %s283 = scalar_select %p280, %s281, %s282
      %p286 = pneg %p280
      %p287 = scmp.eq.s32.totalorder %s32, 2
      %p288 = por %p286, %p287
      %p289 = scmp.ne.s32.totalorder %s281, %s284
      %p290 = scmp.eq.s32.totalorder %s32, 0
      %p291 = por %p289, %p290
      %p292 = scmp.ne.s32.totalorder %s281, %s284
      %p293 = scmp.eq.s32.totalorder %s37, 2
      %p294 = por %p292, %p293
      %p295 = scmp.ne.s32.totalorder %s284, %s285
      %p296 = scmp.eq.s32.totalorder %s37, 0
      %p297 = por %p295, %p296
      %p298 = scmp.ne.s32.totalorder %s284, %s285
      %p299 = scmp.eq.s32.totalorder %s38, 2
      %p300 = por %p298, %p299
      %p302 = scmp.ne.s32.totalorder %s285, %s301
      %p303 = scmp.eq.s32.totalorder %s38, 0
      %p304 = por %p302, %p303
      %s305 = ssub.s32 %s39, 1
      %p306 = scmp.gt.s32.totalorder %s305, 0
      %s307 = scalar_select %p306, %s305, 0
      %s308 = ssub.s32 %s51, 1
      %p309 = scmp.gt.s32.totalorder %s308, 0
      %s310 = scalar_select %p309, %s308, 0
      %s311 = ssub.s32 %s307, %s310
      %p312 = scmp.eq.s32.totalorder %s311, 0
      %s314 = sadd.s32 %s313, 1
      %s315 = scalar_select %p312, %s313, %s314
      %p318 = pneg %p312
      %p319 = scmp.eq.s32.totalorder %s32, 2
      %p320 = por %p318, %p319
      %p321 = scmp.ne.s32.totalorder %s313, %s316
      %p322 = scmp.eq.s32.totalorder %s32, 0
      %p323 = por %p321, %p322
      %p324 = scmp.ne.s32.totalorder %s313, %s316
      %p325 = scmp.eq.s32.totalorder %s37, 2
      %p326 = por %p324, %p325
      %p327 = scmp.ne.s32.totalorder %s316, %s317
      %p328 = scmp.eq.s32.totalorder %s37, 0
      %p329 = por %p327, %p328
      %p330 = scmp.ne.s32.totalorder %s316, %s317
      %p331 = scmp.eq.s32.totalorder %s38, 2
      %p332 = por %p330, %p331
      %p334 = scmp.ne.s32.totalorder %s317, %s333
      %p335 = scmp.eq.s32.totalorder %s38, 0
      %p336 = por %p334, %p335
      %s337 = ssub.s32 %s39, 1
      %p338 = scmp.gt.s32.totalorder %s337, 0
      %s339 = scalar_select %p338, %s337, 0
      %s340 = ssub.s32 %s51, 1
      %p341 = scmp.gt.s32.totalorder %s340, 0
      %s342 = scalar_select %p341, %s340, 0
      %s343 = ssub.s32 %s339, %s342
      %p344 = scmp.eq.s32.totalorder %s343, 0
      %s346 = sadd.s32 %s345, 1
      %s347 = scalar_select %p344, %s345, %s346
      %p350 = pneg %p344
      %p351 = scmp.eq.s32.totalorder %s32, 2
      %p352 = por %p350, %p351
      %p353 = scmp.ne.s32.totalorder %s345, %s348
      %p354 = scmp.eq.s32.totalorder %s32, 0
      %p355 = por %p353, %p354
      %p356 = scmp.ne.s32.totalorder %s345, %s348
      %p357 = scmp.eq.s32.totalorder %s37, 2
      %p358 = por %p356, %p357
      %p359 = scmp.ne.s32.totalorder %s348, %s349
      %p360 = scmp.eq.s32.totalorder %s37, 0
      %p361 = por %p359, %p360
      %p362 = scmp.ne.s32.totalorder %s348, %s349
      %p363 = scmp.eq.s32.totalorder %s38, 2
      %p364 = por %p362, %p363
      %p366 = scmp.ne.s32.totalorder %s349, %s365
      %p367 = scmp.eq.s32.totalorder %s38, 0
      %p368 = por %p366, %p367
      %s370 = sadd.s32 %s369, 1
      %p373 = scmp.eq.s32.totalorder %s32, 2
      %p374 = scmp.ne.s32.totalorder %s369, %s371
      %p375 = scmp.eq.s32.totalorder %s32, 0
      %p376 = por %p374, %p375
      %p377 = scmp.ne.s32.totalorder %s369, %s371
      %p378 = scmp.eq.s32.totalorder %s37, 2
      %p379 = por %p377, %p378
      %p380 = scmp.ne.s32.totalorder %s371, %s372
      %p381 = scmp.eq.s32.totalorder %s37, 0
      %p382 = por %p380, %p381
      %p383 = scmp.ne.s32.totalorder %s371, %s372
      %p384 = scmp.eq.s32.totalorder %s38, 2
      %p385 = por %p383, %p384
      %p387 = scmp.ne.s32.totalorder %s372, %s386
      %p388 = scmp.eq.s32.totalorder %s38, 0
      %p389 = por %p387, %p388
      %s391 = sadd.s32 %s390, 1
      %p394 = scmp.eq.s32.totalorder %s32, 2
      %p395 = scmp.ne.s32.totalorder %s390, %s392
      %p396 = scmp.eq.s32.totalorder %s32, 0
      %p397 = por %p395, %p396
      %p398 = scmp.ne.s32.totalorder %s390, %s392
      %p399 = scmp.eq.s32.totalorder %s37, 2
      %p400 = por %p398, %p399
      %p401 = scmp.ne.s32.totalorder %s392, %s393
      %p402 = scmp.eq.s32.totalorder %s37, 0
      %p403 = por %p401, %p402
      %p404 = scmp.ne.s32.totalorder %s392, %s393
      %p405 = scmp.eq.s32.totalorder %s38, 2
      %p406 = por %p404, %p405
      %p408 = scmp.ne.s32.totalorder %s393, %s407
      %p409 = scmp.eq.s32.totalorder %s38, 0
      %p410 = por %p408, %p409
      %p411 = scmp.eq.s32.totalorder %s39, 2
      %s412 = scalar_select %p411, %s40, 0
      %p413 = scmp.eq.s32.totalorder %s51, 2
      %s414 = scalar_select %p413, %s47, 0
      %s415 = ssub.s32 %s412, %s414
      %p416 = scmp.eq.s32.totalorder %s415, 0
      %s418 = sadd.s32 %s417, 1
      %s419 = scalar_select %p416, %s417, %s418
      %p422 = pneg %p416
      %p423 = scmp.eq.s32.totalorder %s32, 2
      %p424 = por %p422, %p423
      %p425 = scmp.ne.s32.totalorder %s417, %s420
      %p426 = scmp.eq.s32.totalorder %s32, 0
      %p427 = por %p425, %p426
      %p428 = scmp.ne.s32.totalorder %s417, %s420
      %p429 = scmp.eq.s32.totalorder %s37, 2
      %p430 = por %p428, %p429
      %p431 = scmp.ne.s32.totalorder %s420, %s421
      %p432 = scmp.eq.s32.totalorder %s37, 0
      %p433 = por %p431, %p432
      %p434 = scmp.ne.s32.totalorder %s420, %s421
      %p435 = scmp.eq.s32.totalorder %s38, 2
      %p436 = por %p434, %p435
      %p438 = scmp.ne.s32.totalorder %s421, %s437
      %p439 = scmp.eq.s32.totalorder %s38, 0
      %p440 = por %p438, %p439
      %p441 = scmp.le.s32.totalorder 1, %s32
      %p442 = scmp.lt.s32.totalorder %s32, 4
      %p443 = pnand %p441, %p442
      %p444 = pneg %p443
      // Predicated region
      $region9: #{tpu_custom_call.1} parent=5 // pred_check
        _
      $region10: #{tpu_custom_call.1} parent=5 // pred_check_branch
        %446 = sbr.rel (%p443) target = $region12
      $region11: #{tpu_custom_call.1} parent=5 // pred_region
        %s447 = ssub.s32 %s32, 1
        // Predicated region
        $region13: #{tpu_custom_call.1} parent=11 // pred_check
          %p448 = pneg %p65
        $region14: #{tpu_custom_call.1} parent=11 // pred_check_branch
          %450 = sbr.rel (%p448) target = $region16
        $region15: #{tpu_custom_call.1} parent=11 // pred_region
          %s452 = ssub.s32 1024, 1024
          %453 = vsyncadd [#allocation4], %s452
          %s454 = sshll.u32 [#allocation3], 4
          %s455 = int_to_ptr.vmem [resolvable:$true] %s454
          %460 = dma.hbm_to_vmem [thread:$0]  %s0, 1024, %s455, [#allocation4], 64, 64, 4
        $region16: #{tpu_custom_call.1} parent=11 // pred_fallthru
          _
        // Predicated region
        $region17: #{tpu_custom_call.1} parent=11 // pred_check
          %p461 = pneg %p116
        $region18: #{tpu_custom_call.1} parent=11 // pred_check_branch
          %463 = sbr.rel (%p461) target = $region20
        $region19: #{tpu_custom_call.1} parent=11 // pred_region
          %s465 = ssub.s32 1024, 1024
          %466 = vsyncadd [#allocation7], %s465
          %s467 = sshll.u32 [#allocation8], 4
          %s468 = int_to_ptr.vmem [resolvable:$true] %s467
          %473 = dma.hbm_to_vmem [thread:$0]  %s2, 1024, %s468, [#allocation7], 64, 64, 4
        $region20: #{tpu_custom_call.1} parent=11 // pred_fallthru
          _
        // Predicated region
        $region21: #{tpu_custom_call.1} parent=11 // pred_check
          %p474 = pneg %p137
        $region22: #{tpu_custom_call.1} parent=11 // pred_check_branch
          %476 = sbr.rel (%p474) target = $region24
        $region23: #{tpu_custom_call.1} parent=11 // pred_region
          _
        $region24: #{tpu_custom_call.1} parent=11 // pred_fallthru
          _
        // Predicated region
        $region25: #{tpu_custom_call.1} parent=11 // pred_check
          %p477 = pneg %p382
        $region26: #{tpu_custom_call.1} parent=11 // pred_check_branch
          %479 = sbr.rel (%p477) target = $region28
        $region27: #{tpu_custom_call.1} parent=11 // pred_region
          %s481 = ssub.s32 1024, 1024
          %482 = vsyncadd [#allocation13], %s481
          %s483 = sshll.u32 [#allocation14], 4
          %s484 = int_to_ptr.vmem [resolvable:$true] %s483
          %489 = dma.hbm_to_vmem [thread:$0]  %s11, 1024, %s484, [#allocation13], 64, 64, 4
        $region28: #{tpu_custom_call.1} parent=11 // pred_fallthru
          _
        // Predicated region
        $region29: #{tpu_custom_call.1} parent=11 // pred_check
          %p490 = pneg %p403
        $region30: #{tpu_custom_call.1} parent=11 // pred_check_branch
          %492 = sbr.rel (%p490) target = $region32
        $region31: #{tpu_custom_call.1} parent=11 // pred_region
          _
        $region32: #{tpu_custom_call.1} parent=11 // pred_fallthru
          _
      $region12: #{tpu_custom_call.1} parent=5 // pred_fallthru
        _
      %p493 = scmp.lt.s32.totalorder %s32, 3
      // Predicated region
      $region33: #{tpu_custom_call.1} parent=5 // pred_check
        %p494 = pneg %p493
      $region34: #{tpu_custom_call.1} parent=5 // pred_check_branch
        %496 = sbr.rel (%p494) target = $region36
      $region35: #{tpu_custom_call.1} parent=5 // pred_region
        // Predicated region
        $region37: #{tpu_custom_call.1} parent=35 // pred_check
          %p497 = pneg %p89
        $region38: #{tpu_custom_call.1} parent=35 // pred_check_branch
          %499 = sbr.rel (%p497) target = $region40
        $region39: #{tpu_custom_call.1} parent=35 // pred_region
          %s500 = sand.u32 %s32, 1
          %s501 = scalar_lea.sflag [#allocation7], %s500
          %s502 = sand.u32 %s79, 1
          %s503 = smul.addr %s502, 64
          %s504 = scalar_lea.vmem [#allocation6], %s503
          %p505 = scmp.eq.s32.totalorder %s39, 0
          %s506 = scalar_select %p505, %s40, 0
          %s507 = smul.u32 16, %s506
          %s509 = ssub.s32 1024, 1024
          %510 = vsyncadd %s501, %s509
          %s511 = smul.addr %s507, 64
          %s512 = scalar_lea.hbm %s1, %s511
          %s513 = sshll.u32 %s504, 4
          %s514 = int_to_ptr.vmem [resolvable:$true] %s513
          %519 = dma.hbm_to_vmem [thread:$0]  %s512, 1024, %s514, %s501, 64, 64, 4
        $region40: #{tpu_custom_call.1} parent=35 // pred_fallthru
          _
        // Predicated region
        $region41: #{tpu_custom_call.1} parent=35 // pred_check
          %p520 = pneg %p163
        $region42: #{tpu_custom_call.1} parent=35 // pred_check_branch
          %522 = sbr.rel (%p520) target = $region44
        $region43: #{tpu_custom_call.1} parent=35 // pred_region
          %s523 = sand.u32 %s32, 1
          %s524 = scalar_lea.sflag [#allocation10], %s523
          %s525 = sand.u32 %s153, 1
          %s526 = smul.addr %s525, 64
          %s527 = scalar_lea.vmem [#allocation9], %s526
          %s528 = ssub.s32 %s39, 1
          %p529 = scmp.gt.s32.totalorder %s528, 0
          %s530 = scalar_select %p529, %s528, 0
          %s532 = ssub.s32 1024, 1024
          %533 = vsyncadd %s524, %s532
          %s534 = smul.addr %s530, 16
          %s535 = smul.addr %s534, 64
          %s536 = scalar_lea.hbm %s4, %s535
          %s537 = sshll.u32 %s527, 4
          %s538 = int_to_ptr.vmem [resolvable:$true] %s537
          %543 = dma.hbm_to_vmem [thread:$0]  %s536, 1024, %s538, %s524, 64, 64, 4
        $region44: #{tpu_custom_call.1} parent=35 // pred_fallthru
          _
        // Predicated region
        $region45: #{tpu_custom_call.1} parent=35 // pred_check
          %p544 = pneg %p195
        $region46: #{tpu_custom_call.1} parent=35 // pred_check_branch
          %546 = sbr.rel (%p544) target = $region48
        $region47: #{tpu_custom_call.1} parent=35 // pred_region
          %s547 = ssub.s32 %s39, 1
          %p548 = scmp.gt.s32.totalorder %s547, 0
          %s549 = scalar_select %p548, %s547, 0
          %p550 = scmp.lt.s32.totalorder %s549, 1
          %s551 = scalar_select %p550, %s549, 1
          %s552 = scalar_lea.vmem %s5, %s551
          %s553 = ssub.s32 %s39, 1
          %p554 = scmp.gt.s32.totalorder %s553, 0
          %s555 = scalar_select %p554, %s553, 0
        $region48: #{tpu_custom_call.1} parent=35 // pred_fallthru
          _
        // Predicated region
        $region49: #{tpu_custom_call.1} parent=35 // pred_check
          %p556 = pneg %p227
        $region50: #{tpu_custom_call.1} parent=35 // pred_check_branch
          %558 = sbr.rel (%p556) target = $region52
        $region51: #{tpu_custom_call.1} parent=35 // pred_region
          %s559 = ssub.s32 %s39, 1
          %p560 = scmp.gt.s32.totalorder %s559, 0
          %s561 = scalar_select %p560, %s559, 0
          %p562 = scmp.lt.s32.totalorder %s561, 1
          %s563 = scalar_select %p562, %s561, 1
          %s564 = scalar_lea.vmem %s6, %s563
          %s565 = ssub.s32 %s39, 1
          %p566 = scmp.gt.s32.totalorder %s565, 0
          %s567 = scalar_select %p566, %s565, 0
        $region52: #{tpu_custom_call.1} parent=35 // pred_fallthru
          _
        // Predicated region
        $region53: #{tpu_custom_call.1} parent=35 // pred_check
          %p568 = pneg %p259
        $region54: #{tpu_custom_call.1} parent=35 // pred_check_branch
          %570 = sbr.rel (%p568) target = $region56
        $region55: #{tpu_custom_call.1} parent=35 // pred_region
          %s571 = sand.u32 %s32, 1
          %s572 = scalar_lea.sflag [#allocation10], %s571
          %s573 = sand.u32 %s249, 1
          %s574 = smul.addr %s573, 64
          %s575 = scalar_lea.vmem [#allocation11], %s574
          %s576 = ssub.s32 %s39, 1
          %p577 = scmp.gt.s32.totalorder %s576, 0
          %s578 = scalar_select %p577, %s576, 0
          %s580 = ssub.s32 1024, 1024
          %581 = vsyncadd %s572, %s580
          %s582 = smul.addr %s578, 16
          %s583 = smul.addr %s582, 64
          %s584 = scalar_lea.hbm %s7, %s583
          %s585 = sshll.u32 %s575, 4
          %s586 = int_to_ptr.vmem [resolvable:$true] %s585
          %591 = dma.hbm_to_vmem [thread:$0]  %s584, 1024, %s586, %s572, 64, 64, 4
        $region56: #{tpu_custom_call.1} parent=35 // pred_fallthru
          _
        // Predicated region
        $region57: #{tpu_custom_call.1} parent=35 // pred_check
          %p592 = pneg %p291
        $region58: #{tpu_custom_call.1} parent=35 // pred_check_branch
          %594 = sbr.rel (%p592) target = $region60
        $region59: #{tpu_custom_call.1} parent=35 // pred_region
          %s595 = ssub.s32 %s39, 1
          %p596 = scmp.gt.s32.totalorder %s595, 0
          %s597 = scalar_select %p596, %s595, 0
          %p598 = scmp.lt.s32.totalorder %s597, 1
          %s599 = scalar_select %p598, %s597, 1
          %s600 = scalar_lea.vmem %s8, %s599
          %s601 = ssub.s32 %s39, 1
          %p602 = scmp.gt.s32.totalorder %s601, 0
          %s603 = scalar_select %p602, %s601, 0
        $region60: #{tpu_custom_call.1} parent=35 // pred_fallthru
          _
        // Predicated region
        $region61: #{tpu_custom_call.1} parent=35 // pred_check
          %p604 = pneg %p323
        $region62: #{tpu_custom_call.1} parent=35 // pred_check_branch
          %606 = sbr.rel (%p604) target = $region64
        $region63: #{tpu_custom_call.1} parent=35 // pred_region
          %s607 = sand.u32 %s32, 1
          %s608 = scalar_lea.sflag [#allocation13], %s607
          %s609 = sand.u32 %s313, 1
          %s610 = smul.addr %s609, 64
          %s611 = scalar_lea.vmem [#allocation12], %s610
          %s612 = ssub.s32 %s39, 1
          %p613 = scmp.gt.s32.totalorder %s612, 0
          %s614 = scalar_select %p613, %s612, 0
          %s616 = ssub.s32 1024, 1024
          %617 = vsyncadd %s608, %s616
          %s618 = smul.addr %s614, 16
          %s619 = smul.addr %s618, 64
          %s620 = scalar_lea.hbm %s9, %s619
          %s621 = sshll.u32 %s611, 4
          %s622 = int_to_ptr.vmem [resolvable:$true] %s621
          %627 = dma.hbm_to_vmem [thread:$0]  %s620, 1024, %s622, %s608, 64, 64, 4
        $region64: #{tpu_custom_call.1} parent=35 // pred_fallthru
          _
        // Predicated region
        $region65: #{tpu_custom_call.1} parent=35 // pred_check
          %p628 = pneg %p355
        $region66: #{tpu_custom_call.1} parent=35 // pred_check_branch
          %630 = sbr.rel (%p628) target = $region68
        $region67: #{tpu_custom_call.1} parent=35 // pred_region
          %s631 = ssub.s32 %s39, 1
          %p632 = scmp.gt.s32.totalorder %s631, 0
          %s633 = scalar_select %p632, %s631, 0
          %p634 = scmp.lt.s32.totalorder %s633, 1
          %s635 = scalar_select %p634, %s633, 1
          %s636 = scalar_lea.vmem %s10, %s635
          %s637 = ssub.s32 %s39, 1
          %p638 = scmp.gt.s32.totalorder %s637, 0
          %s639 = scalar_select %p638, %s637, 0
        $region68: #{tpu_custom_call.1} parent=35 // pred_fallthru
          _
      $region36: #{tpu_custom_call.1} parent=5 // pred_fallthru
        _
      %p640 = scmp.le.s32.totalorder 1, %s32
      %p641 = scmp.lt.s32.totalorder %s32, 4
      %p642 = pnand %p640, %p641
      %p643 = pneg %p642
      // Predicated region
      $region69: #{tpu_custom_call.1} parent=5 // pred_check
        _
      $region70: #{tpu_custom_call.1} parent=5 // pred_check_branch
        %645 = sbr.rel (%p642) target = $region72
      $region71: #{tpu_custom_call.1} parent=5 // pred_region
        %s646 = ssub.s32 %s32, 1
        // Predicated region
        $region73: #{tpu_custom_call.1} parent=71 // pred_check
          %p647 = pneg %p65
        $region74: #{tpu_custom_call.1} parent=71 // pred_check_branch
          %649 = sbr.rel (%p647) target = $region76
        $region75: #{tpu_custom_call.1} parent=71 // pred_region
          %650 = dma.done [#allocation4], 1024
        $region76: #{tpu_custom_call.1} parent=71 // pred_fallthru
          _
        %s651 = sand.u32 %s37, 1
        %s652 = scalar_lea.sflag [#allocation7], %s651
        %s653 = sand.u32 %s82, 1
        %s654 = smul.addr %s653, 64
        %s655 = scalar_lea.vmem [#allocation6], %s654
        // Predicated region
        $region77: #{tpu_custom_call.1} parent=71 // pred_check
          %p656 = pneg %p95
        $region78: #{tpu_custom_call.1} parent=71 // pred_check_branch
          %658 = sbr.rel (%p656) target = $region80
        $region79: #{tpu_custom_call.1} parent=71 // pred_region
          %659 = dma.done %s652, 1024
        $region80: #{tpu_custom_call.1} parent=71 // pred_fallthru
          _
        // Predicated region
        $region81: #{tpu_custom_call.1} parent=71 // pred_check
          %p660 = pneg %p116
        $region82: #{tpu_custom_call.1} parent=71 // pred_check_branch
          %662 = sbr.rel (%p660) target = $region84
        $region83: #{tpu_custom_call.1} parent=71 // pred_region
          %663 = dma.done [#allocation7], 1024
        $region84: #{tpu_custom_call.1} parent=71 // pred_fallthru
          _
        %s664 = sand.u32 %s37, 1
        %s665 = scalar_lea.sflag [#allocation10], %s664
        %s666 = sand.u32 %s156, 1
        %s667 = smul.addr %s666, 64
        %s668 = scalar_lea.vmem [#allocation9], %s667
        // Predicated region
        $region85: #{tpu_custom_call.1} parent=71 // pred_check
          %p669 = pneg %p169
        $region86: #{tpu_custom_call.1} parent=71 // pred_check_branch
          %671 = sbr.rel (%p669) target = $region88
        $region87: #{tpu_custom_call.1} parent=71 // pred_region
          %672 = dma.done %s665, 1024
        $region88: #{tpu_custom_call.1} parent=71 // pred_fallthru
          _
        %s673 = sand.u32 %s37, 1
        %s674 = scalar_lea.sflag [#allocation10], %s673
        %s675 = sand.u32 %s252, 1
        %s676 = smul.addr %s675, 64
        %s677 = scalar_lea.vmem [#allocation11], %s676
        // Predicated region
        $region89: #{tpu_custom_call.1} parent=71 // pred_check
          %p678 = pneg %p265
        $region90: #{tpu_custom_call.1} parent=71 // pred_check_branch
          %680 = sbr.rel (%p678) target = $region92
        $region91: #{tpu_custom_call.1} parent=71 // pred_region
          %681 = dma.done %s674, 1024
        $region92: #{tpu_custom_call.1} parent=71 // pred_fallthru
          _
        %s682 = sand.u32 %s37, 1
        %s683 = scalar_lea.sflag [#allocation13], %s682
        %s684 = sand.u32 %s316, 1
        %s685 = smul.addr %s684, 64
        %s686 = scalar_lea.vmem [#allocation12], %s685
        // Predicated region
        $region93: #{tpu_custom_call.1} parent=71 // pred_check
          %p687 = pneg %p329
        $region94: #{tpu_custom_call.1} parent=71 // pred_check_branch
          %689 = sbr.rel (%p687) target = $region96
        $region95: #{tpu_custom_call.1} parent=71 // pred_region
          %690 = dma.done %s683, 1024
        $region96: #{tpu_custom_call.1} parent=71 // pred_fallthru
          _
        // Predicated region
        $region97: #{tpu_custom_call.1} parent=71 // pred_check
          %p691 = pneg %p382
        $region98: #{tpu_custom_call.1} parent=71 // pred_check_branch
          %693 = sbr.rel (%p691) target = $region100
        $region99: #{tpu_custom_call.1} parent=71 // pred_region
          %694 = dma.done [#allocation13], 1024
        $region100: #{tpu_custom_call.1} parent=71 // pred_fallthru
          _
        %p695 = pneg %p65
        %p696 = pneg %p62
        %s697 = sand.u32 %s37, 1
        %s698 = scalar_lea.sflag [#allocation7], %s697
        %s699 = sand.u32 %s82, 1
        %s700 = smul.addr %s699, 64
        %s701 = scalar_lea.vmem [#allocation6], %s700
        %p702 = pneg %p95
        %p703 = pneg %p92
        %p704 = pneg %p116
        %p705 = pneg %p113
        %p706 = pneg %p137
        %p707 = pneg %p134
        %s708 = sand.u32 %s37, 1
        %s709 = scalar_lea.sflag [#allocation10], %s708
        %s710 = sand.u32 %s156, 1
        %s711 = smul.addr %s710, 64
        %s712 = scalar_lea.vmem [#allocation9], %s711
        %p713 = pneg %p169
        %p714 = pneg %p166
        %s715 = ssub.s32 %s41, 1
        %p716 = scmp.gt.s32.totalorder %s715, 0
        %s717 = scalar_select %p716, %s715, 0
        %p718 = scmp.lt.s32.totalorder %s717, 1
        %s719 = scalar_select %p718, %s717, 1
        %s720 = scalar_lea.vmem %s5, %s719
        %p721 = pneg %p201
        %p722 = pneg %p198
        %s723 = ssub.s32 %s41, 1
        %p724 = scmp.gt.s32.totalorder %s723, 0
        %s725 = scalar_select %p724, %s723, 0
        %p726 = scmp.lt.s32.totalorder %s725, 1
        %s727 = scalar_select %p726, %s725, 1
        %s728 = scalar_lea.vmem %s6, %s727
        %p729 = pneg %p233
        %p730 = pneg %p230
        %s731 = sand.u32 %s37, 1
        %s732 = scalar_lea.sflag [#allocation10], %s731
        %s733 = sand.u32 %s252, 1
        %s734 = smul.addr %s733, 64
        %s735 = scalar_lea.vmem [#allocation11], %s734
        %p736 = pneg %p265
        %p737 = pneg %p262
        %s738 = ssub.s32 %s41, 1
        %p739 = scmp.gt.s32.totalorder %s738, 0
        %s740 = scalar_select %p739, %s738, 0
        %p741 = scmp.lt.s32.totalorder %s740, 1
        %s742 = scalar_select %p741, %s740, 1
        %s743 = scalar_lea.vmem %s8, %s742
        %p744 = pneg %p297
        %p745 = pneg %p294
        %s746 = sand.u32 %s37, 1
        %s747 = scalar_lea.sflag [#allocation13], %s746
        %s748 = sand.u32 %s316, 1
        %s749 = smul.addr %s748, 64
        %s750 = scalar_lea.vmem [#allocation12], %s749
        %p751 = pneg %p329
        %p752 = pneg %p326
        %s753 = ssub.s32 %s41, 1
        %p754 = scmp.gt.s32.totalorder %s753, 0
        %s755 = scalar_select %p754, %s753, 0
        %p756 = scmp.lt.s32.totalorder %s755, 1
        %s757 = scalar_select %p756, %s755, 1
        %s758 = scalar_lea.vmem %s10, %s757
        %p759 = pneg %p361
        %p760 = pneg %p358
        %p761 = pneg %p382
        %p762 = pneg %p379
        %p763 = pneg %p403
        %p764 = pneg %p400
        %p765 = pneg %p433
        %p766 = pneg %p430
        %s767 = sand.u32 %s420, 1
        %s768 = scalar_lea.sflag [#allocation5], %s767
        %s769 = sand.u32 %s420, 1
        %s770 = smul.addr %s769, 128
        %s771 = scalar_lea.vmem [#allocation15], %s770
        %p772 = scmp.eq.s32.totalorder %s41, 0
        %s773 = scalar_select %p772, %s42, 0
        %s774 = smul.u32 16, %s773
        %s775 = ssub.s32 %s41, 1
        %p776 = scmp.gt.s32.totalorder %s775, 0
        %s777 = scalar_select %p776, %s775, 0
        %s778 = ssub.s32 %s41, 1
        %p779 = scmp.gt.s32.totalorder %s778, 0
        %s780 = scalar_select %p779, %s778, 0
        %p781 = scmp.lt.s32.totalorder %s780, 1
        %s782 = scalar_select %p781, %s780, 1
        %s783 = scalar_lea.vmem %s5, %s782
        %s784 = ssub.s32 %s41, 1
        %p785 = scmp.gt.s32.totalorder %s784, 0
        %s786 = scalar_select %p785, %s784, 0
        %s787 = ssub.s32 %s41, 1
        %p788 = scmp.gt.s32.totalorder %s787, 0
        %s789 = scalar_select %p788, %s787, 0
        %p790 = scmp.lt.s32.totalorder %s789, 1
        %s791 = scalar_select %p790, %s789, 1
        %s792 = scalar_lea.vmem %s6, %s791
        %s793 = ssub.s32 %s41, 1
        %p794 = scmp.gt.s32.totalorder %s793, 0
        %s795 = scalar_select %p794, %s793, 0
        %s796 = ssub.s32 %s41, 1
        %p797 = scmp.gt.s32.totalorder %s796, 0
        %s798 = scalar_select %p797, %s796, 0
        %s799 = ssub.s32 %s41, 1
        %p800 = scmp.gt.s32.totalorder %s799, 0
        %s801 = scalar_select %p800, %s799, 0
        %p802 = scmp.lt.s32.totalorder %s801, 1
        %s803 = scalar_select %p802, %s801, 1
        %s804 = scalar_lea.vmem %s8, %s803
        %s805 = ssub.s32 %s41, 1
        %p806 = scmp.gt.s32.totalorder %s805, 0
        %s807 = scalar_select %p806, %s805, 0
        %s808 = ssub.s32 %s41, 1
        %p809 = scmp.gt.s32.totalorder %s808, 0
        %s810 = scalar_select %p809, %s808, 0
        %s811 = ssub.s32 %s41, 1
        %p812 = scmp.gt.s32.totalorder %s811, 0
        %s813 = scalar_select %p812, %s811, 0
        %p814 = scmp.lt.s32.totalorder %s813, 1
        %s815 = scalar_select %p814, %s813, 1
        %s816 = scalar_lea.vmem %s10, %s815
        %s817 = ssub.s32 %s41, 1
        %p818 = scmp.gt.s32.totalorder %s817, 0
        %s819 = scalar_select %p818, %s817, 0
        %p820 = scmp.eq.s32.totalorder %s41, 2
        %s821 = scalar_select %p820, %s42, 0
        %s822 = smul.u32 16, %s821
        %s824 = smul.u32 %s42, 128
        %p825 = scmp.eq.s32.totalorder %s41, 0
        // Predicated region
        $region101: #{tpu_custom_call.1} parent=71 // pred_check
          %p826 = pneg %p825
        $region102: #{tpu_custom_call.1} parent=71 // pred_check_branch
          %828 = sbr.rel (%p826) target = $region104
        $region103: #{tpu_custom_call.1} parent=71 // pred_region
          %v829 = vld [vmem:[%s655] sm:$0xf]
          %v830 = vld [vmem:[%s655 + $0x4] sm:$0xf]
          %v831 = vld [vmem:[%s655 + $0x8] sm:$0xf]
          %v832 = vld [vmem:[%s655 + $0xc] sm:$0xf]
          %v833 = vld [vmem:[%s655 + $0x10] sm:$0xf]
          %v834 = vld [vmem:[%s655 + $0x14] sm:$0xf]
          %v835 = vld [vmem:[%s655 + $0x18] sm:$0xf]
          %v836 = vld [vmem:[%s655 + $0x1c] sm:$0xf]
          %v837 = vld [vmem:[%s655 + $0x20] sm:$0xf]
          %v838 = vld [vmem:[%s655 + $0x24] sm:$0xf]
          %v839 = vld [vmem:[%s655 + $0x28] sm:$0xf]
          %v840 = vld [vmem:[%s655 + $0x2c] sm:$0xf]
          %v841 = vld [vmem:[%s655 + $0x30] sm:$0xf]
          %v842 = vld [vmem:[%s655 + $0x34] sm:$0xf]
          %v843 = vld [vmem:[%s655 + $0x38] sm:$0xf]
          %v844 = vld [vmem:[%s655 + $0x3c] sm:$0xf]
          %v845 = vld [vmem:[#allocation8] sm:$0xf]
          %v846 = vld [vmem:[#allocation8 + $0x4] sm:$0xf]
          %v847 = vld [vmem:[#allocation8 + $0x8] sm:$0xf]
          %v848 = vld [vmem:[#allocation8 + $0xc] sm:$0xf]
          %v849 = vld [vmem:[#allocation8 + $0x10] sm:$0xf]
          %v850 = vld [vmem:[#allocation8 + $0x14] sm:$0xf]
          %v851 = vld [vmem:[#allocation8 + $0x18] sm:$0xf]
          %v852 = vld [vmem:[#allocation8 + $0x1c] sm:$0xf]
          %v853 = vld [vmem:[#allocation8 + $0x20] sm:$0xf]
          %v854 = vld [vmem:[#allocation8 + $0x24] sm:$0xf]
          %v855 = vld [vmem:[#allocation8 + $0x28] sm:$0xf]
          %v856 = vld [vmem:[#allocation8 + $0x2c] sm:$0xf]
          %v857 = vld [vmem:[#allocation8 + $0x30] sm:$0xf]
          %v858 = vld [vmem:[#allocation8 + $0x34] sm:$0xf]
          %v859 = vld [vmem:[#allocation8 + $0x38] sm:$0xf]
          %v860 = vld [vmem:[#allocation8 + $0x3c] sm:$0xf]
          %v861 = vld [vmem:[%s3] sm:$0x1]
          %v863 = vlaneseq
          %v864 = vshrl.u32 %v863, 7
          %v865 = vsub.s32 0, %v864
          %v866 = vrot.slane %v861, %v865
          %v884 = vunpack.c.l.b16 %v829
          %v885 = vunpack.c.l.b16 %v830
          %v886 = vunpack.c.l.b16 %v831
          %v887 = vunpack.c.l.b16 %v832
          %v888 = vunpack.c.l.b16 %v833
          %v889 = vunpack.c.l.b16 %v834
          %v890 = vunpack.c.l.b16 %v835
          %v891 = vunpack.c.l.b16 %v836
          %v892 = vunpack.c.l.b16 %v837
          %v893 = vunpack.c.l.b16 %v838
          %v894 = vunpack.c.l.b16 %v839
          %v895 = vunpack.c.l.b16 %v840
          %v896 = vunpack.c.l.b16 %v841
          %v897 = vunpack.c.l.b16 %v842
          %v898 = vunpack.c.l.b16 %v843
          %v899 = vunpack.c.l.b16 %v844
          %v900 = vpack.c.b16 %v885, %v884
          %v901 = vpack.c.b16 %v887, %v886
          %v902 = vpack.c.b16 %v889, %v888
          %v903 = vpack.c.b16 %v891, %v890
          %v904 = vpack.c.b16 %v893, %v892
          %v905 = vpack.c.b16 %v895, %v894
          %v906 = vpack.c.b16 %v897, %v896
          %v907 = vpack.c.b16 %v899, %v898
          %v932 = vunpack.c.l.b16 %v845
          %v933 = vunpack.c.l.b16 %v846
          %v934 = vunpack.c.l.b16 %v847
          %v935 = vunpack.c.l.b16 %v848
          %v936 = vunpack.c.l.b16 %v849
          %v937 = vunpack.c.l.b16 %v850
          %v938 = vunpack.c.l.b16 %v851
          %v939 = vunpack.c.l.b16 %v852
          %v940 = vunpack.c.l.b16 %v853
          %v941 = vunpack.c.l.b16 %v854
          %v942 = vunpack.c.l.b16 %v855
          %v943 = vunpack.c.l.b16 %v856
          %v944 = vunpack.c.l.b16 %v857
          %v945 = vunpack.c.l.b16 %v858
          %v946 = vunpack.c.l.b16 %v859
          %v947 = vunpack.c.l.b16 %v860
          %v948 = vpack.c.b16 %v933, %v932
          %v949 = vpack.c.b16 %v935, %v934
          %v950 = vpack.c.b16 %v937, %v936
          %v951 = vpack.c.b16 %v939, %v938
          %v952 = vpack.c.b16 %v941, %v940
          %v953 = vpack.c.b16 %v943, %v942
          %v954 = vpack.c.b16 %v945, %v944
          %v955 = vpack.c.b16 %v947, %v946
          %964 = vmatprep.subr.bf16.mxu0 0
          %965 = vmatpush1.bf16.msra.mxu0 %v948
          %966 = vmatprep.subr.bf16.mxu0 0
          %967 = vmatpush1.bf16.msra.mxu0 %v949
          %968 = vmatprep.subr.bf16.mxu0 0
          %969 = vmatpush1.bf16.msra.mxu0 %v950
          %970 = vmatprep.subr.bf16.mxu0 0
          %971 = vmatpush1.bf16.msra.mxu0 %v951
          %972 = vmatprep.subr.bf16.mxu0 0
          %973 = vmatpush1.bf16.msra.mxu0 %v952
          %974 = vmatprep.subr.bf16.mxu0 0
          %975 = vmatpush1.bf16.msra.mxu0 %v953
          %976 = vmatprep.subr.bf16.mxu0 0
          %977 = vmatpush1.bf16.msra.mxu0 %v954
          %978 = vmatprep.subr.bf16.mxu0 0
          %979 = vmatpush1.bf16.msra.mxu0 %v955
          %980 = vmatprep.subr.bf16.mxu0 0
          %981 = vmatpush1.bf16.msra.mxu0 0
          %982 = vmatprep.subr.bf16.mxu0 0
          %983 = vmatpush1.bf16.msra.mxu0 0
          %984 = vmatprep.subr.bf16.mxu0 0
          %985 = vmatpush1.bf16.msra.mxu0 0
          %986 = vmatprep.subr.bf16.mxu0 0
          %987 = vmatpush1.bf16.msra.mxu0 0
          %988 = vmatprep.subr.bf16.mxu0 0
          %989 = vmatpush1.bf16.msra.mxu0 0
          %990 = vmatprep.subr.bf16.mxu0 0
          %991 = vmatpush1.bf16.msra.mxu0 0
          %992 = vmatprep.subr.bf16.mxu0 0
          %993 = vmatpush1.bf16.msra.mxu0 0
          %994 = vmatprep.subr.bf16.mxu0 0
          %995 = vmatpush1.bf16.msra.mxu0 0
          %996 = vmatprep.mubr.bf16.mxu0 0
          %997 = vmatmul.mubr.bf16.gmra.mrb[0].mxu0 %v900
          %v998 = vpop.f32.mrb[0].mxu0
          %v999 = vadd.f32 %v866, %v998
          %v1000 = vpop.f32.mrb[0].mxu0
          %v1001 = vpop.f32.mrb[0].mxu0
          %v1002 = vadd.f32 %v866, %v1001
          %v1003 = vpop.f32.mrb[0].mxu0
          %1004 = vmatprep.mubr.bf16.mxu0 0
          %1005 = vmatmul.mubr.bf16.gmra.mrb[0].mxu0 %v901
          %v1006 = vpop.f32.mrb[0].mxu0
          %v1007 = vadd.f32 %v866, %v1006
          %v1008 = vpop.f32.mrb[0].mxu0
          %v1009 = vpop.f32.mrb[0].mxu0
          %v1010 = vadd.f32 %v866, %v1009
          %v1011 = vpop.f32.mrb[0].mxu0
          %1012 = vmatprep.mubr.bf16.mxu0 0
          %1013 = vmatmul.mubr.bf16.gmra.mrb[0].mxu0 %v902
          %v1014 = vpop.f32.mrb[0].mxu0
          %v1015 = vadd.f32 %v866, %v1014
          %v1016 = vpop.f32.mrb[0].mxu0
          %v1017 = vpop.f32.mrb[0].mxu0
          %v1018 = vadd.f32 %v866, %v1017
          %v1019 = vpop.f32.mrb[0].mxu0
          %1020 = vmatprep.mubr.bf16.mxu0 0
          %1021 = vmatmul.mubr.bf16.gmra.mrb[0].mxu0 %v903
          %v1022 = vpop.f32.mrb[0].mxu0
          %v1023 = vadd.f32 %v866, %v1022
          %v1024 = vpop.f32.mrb[0].mxu0
          %v1025 = vpop.f32.mrb[0].mxu0
          %v1026 = vadd.f32 %v866, %v1025
          %v1027 = vpop.f32.mrb[0].mxu0
          %1028 = vmatprep.mubr.bf16.mxu0 0
          %1029 = vmatmul.mubr.bf16.gmra.mrb[0].mxu0 %v904
          %v1030 = vpop.f32.mrb[0].mxu0
          %v1031 = vadd.f32 %v866, %v1030
          %v1032 = vpop.f32.mrb[0].mxu0
          %v1033 = vpop.f32.mrb[0].mxu0
          %v1034 = vadd.f32 %v866, %v1033
          %v1035 = vpop.f32.mrb[0].mxu0
          %1036 = vmatprep.mubr.bf16.mxu0 0
          %1037 = vmatmul.mubr.bf16.gmra.mrb[0].mxu0 %v905
          %v1038 = vpop.f32.mrb[0].mxu0
          %v1039 = vadd.f32 %v866, %v1038
          %v1040 = vpop.f32.mrb[0].mxu0
          %v1041 = vpop.f32.mrb[0].mxu0
          %v1042 = vadd.f32 %v866, %v1041
          %v1043 = vpop.f32.mrb[0].mxu0
          %1044 = vmatprep.mubr.bf16.mxu0 0
          %1045 = vmatmul.mubr.bf16.gmra.mrb[0].mxu0 %v906
          %v1046 = vpop.f32.mrb[0].mxu0
          %v1047 = vadd.f32 %v866, %v1046
          %v1048 = vpop.f32.mrb[0].mxu0
          %v1049 = vpop.f32.mrb[0].mxu0
          %v1050 = vadd.f32 %v866, %v1049
          %v1051 = vpop.f32.mrb[0].mxu0
          %1052 = vmatprep.mubr.bf16.mxu0 0
          %1053 = vmatmul.mubr.bf16.gmra.mrb[0].mxu0 %v907
          %v1054 = vpop.f32.mrb[0].mxu0
          %v1055 = vadd.f32 %v866, %v1054
          %v1056 = vpop.f32.mrb[0].mxu0
          %v1057 = vpop.f32.mrb[0].mxu0
          %v1058 = vadd.f32 %v866, %v1057
          %v1059 = vpop.f32.mrb[0].mxu0
          %1060 = vdwg.mxu0
          %v1061 = vmax.f32 %v999, 0.0
          %v1062 = vmax.f32 %v1002, 0.0
          %v1063 = vmax.f32 %v1007, 0.0
          %v1064 = vmax.f32 %v1010, 0.0
          %v1065 = vmax.f32 %v1015, 0.0
          %v1066 = vmax.f32 %v1018, 0.0
          %v1067 = vmax.f32 %v1023, 0.0
          %v1068 = vmax.f32 %v1026, 0.0
          %v1069 = vmax.f32 %v1031, 0.0
          %v1070 = vmax.f32 %v1034, 0.0
          %v1071 = vmax.f32 %v1039, 0.0
          %v1072 = vmax.f32 %v1042, 0.0
          %v1073 = vmax.f32 %v1047, 0.0
          %v1074 = vmax.f32 %v1050, 0.0
          %v1075 = vmax.f32 %v1055, 0.0
          %v1076 = vmax.f32 %v1058, 0.0
          %v1077 = vpack.c.bf16 %v1062, %v1061
          %v1078 = vpack.c.bf16 %v1064, %v1063
          %v1079 = vpack.c.bf16 %v1066, %v1065
          %v1080 = vpack.c.bf16 %v1068, %v1067
          %v1081 = vpack.c.bf16 %v1070, %v1069
          %v1082 = vpack.c.bf16 %v1072, %v1071
          %v1083 = vpack.c.bf16 %v1074, %v1073
          %v1084 = vpack.c.bf16 %v1076, %v1075
          %s1085 = sshra.s32 %s824, 4
          %s1086 = sand.u32 %s824, 15
          %s1087 = smul.addr %s1085, 8
          %s1088 = scalar_lea.vmem [#allocation2], %s1087
          %1089 = vst [vmem:[%s1088] sm:$0xff] %v1077
          %1090 = vst [vmem:[%s1088 + $0x8] sm:$0xff] %v1078
          %1091 = vst [vmem:[%s1088 + $0x10] sm:$0xff] %v1079
          %1092 = vst [vmem:[%s1088 + $0x18] sm:$0xff] %v1080
          %1093 = vst [vmem:[%s1088 + $0x20] sm:$0xff] %v1081
          %1094 = vst [vmem:[%s1088 + $0x28] sm:$0xff] %v1082
          %1095 = vst [vmem:[%s1088 + $0x30] sm:$0xff] %v1083
          %1096 = vst [vmem:[%s1088 + $0x38] sm:$0xff] %v1084
        $region104: #{tpu_custom_call.1} parent=71 // pred_fallthru
          _
        %p1097 = scmp.gt.s32.totalorder %s41, 0
        // Predicated region
        $region105: #{tpu_custom_call.1} parent=71 // pred_check
          %p1098 = pneg %p1097
        $region106: #{tpu_custom_call.1} parent=71 // pred_check_branch
          %1100 = sbr.rel (%p1098) target = $region108
        $region107: #{tpu_custom_call.1} parent=71 // pred_region
          %s1101 = ssub.s32 %s41, 1
          %p1102 = scmp.lt.s32.totalorder %s1101, 0
          %s1103 = ssub.s32 0, %s1101
          %s1104 = scalar_select %p1102, %s1103, %s1101
          %s1105 = sand.u32 %s1104, 1
          %s1106 = ssub.s32 0, %s1105
          %s1107 = scalar_select %p1102, %s1106, %s1105
          %p1108 = scmp.ne.s32.totalorder %s1107, 0
          %p1109 = scmp.lt.s32.totalorder %s1107, 0
          %p1110 = pnand %p1109, %p1108
          %p1111 = pneg %p1110
          %s1112 = sadd.s32 %s1107, 2
          %s1113 = scalar_select %p1111, %s1112, %s1107
          %s1114 = ssub.s32 1, %s1113
          %s1115 = smul.u32 %s1113, 128
          %s1116 = smul.u32 %s1114, 128
          %s1117 = sshra.s32 %s1115, 4
          %s1118 = sand.u32 %s1115, 15
          %s1119 = smul.addr %s1117, 8
          %s1120 = scalar_lea.vmem [#allocation2], %s1119
          %v1121 = vld [vmem:[%s1120] sm:$0xff]
          %v1122 = vld [vmem:[%s1120 + $0x8] sm:$0xff]
          %v1123 = vld [vmem:[%s1120 + $0x10] sm:$0xff]
          %v1124 = vld [vmem:[%s1120 + $0x18] sm:$0xff]
          %v1125 = vld [vmem:[%s1120 + $0x20] sm:$0xff]
          %v1126 = vld [vmem:[%s1120 + $0x28] sm:$0xff]
          %v1127 = vld [vmem:[%s1120 + $0x30] sm:$0xff]
          %v1128 = vld [vmem:[%s1120 + $0x38] sm:$0xff]
          %s1129 = sadd.s32 %s1115, %s824
          %s1130 = sshra.s32 %s1129, 4
          %s1131 = sand.u32 %s1129, 15
          %s1132 = smul.addr %s1130, 8
          %s1133 = scalar_lea.vmem [#allocation2], %s1132
          %v1134 = vld [vmem:[%s1133] sm:$0xff]
          %v1135 = vld [vmem:[%s1133 + $0x8] sm:$0xff]
          %v1136 = vld [vmem:[%s1133 + $0x10] sm:$0xff]
          %v1137 = vld [vmem:[%s1133 + $0x18] sm:$0xff]
          %v1138 = vld [vmem:[%s1133 + $0x20] sm:$0xff]
          %v1139 = vld [vmem:[%s1133 + $0x28] sm:$0xff]
          %v1140 = vld [vmem:[%s1133 + $0x30] sm:$0xff]
          %v1141 = vld [vmem:[%s1133 + $0x38] sm:$0xff]
          %v1142 = vld [vmem:[%s668] sm:$0xf]
          %v1143 = vld [vmem:[%s668 + $0x4] sm:$0xf]
          %v1144 = vld [vmem:[%s668 + $0x8] sm:$0xf]
          %v1145 = vld [vmem:[%s668 + $0xc] sm:$0xf]
          %v1146 = vld [vmem:[%s668 + $0x10] sm:$0xf]
          %v1147 = vld [vmem:[%s668 + $0x14] sm:$0xf]
          %v1148 = vld [vmem:[%s668 + $0x18] sm:$0xf]
          %v1149 = vld [vmem:[%s668 + $0x1c] sm:$0xf]
          %v1150 = vld [vmem:[%s668 + $0x20] sm:$0xf]
          %v1151 = vld [vmem:[%s668 + $0x24] sm:$0xf]
          %v1152 = vld [vmem:[%s668 + $0x28] sm:$0xf]
          %v1153 = vld [vmem:[%s668 + $0x2c] sm:$0xf]
          %v1154 = vld [vmem:[%s668 + $0x30] sm:$0xf]
          %v1155 = vld [vmem:[%s668 + $0x34] sm:$0xf]
          %v1156 = vld [vmem:[%s668 + $0x38] sm:$0xf]
          %v1157 = vld [vmem:[%s668 + $0x3c] sm:$0xf]
          %v1158 = vld [vmem:[%s783] sm:$0x1]
          %v1160 = vlaneseq
          %v1161 = vshrl.u32 %v1160, 7
          %v1162 = vsub.s32 0, %v1161
          %v1163 = vrot.slane %v1158, %v1162
          %v1181 = vunpack.c.l.b16 %v1142
          %v1182 = vunpack.c.l.b16 %v1143
          %v1183 = vunpack.c.l.b16 %v1144
          %v1184 = vunpack.c.l.b16 %v1145
          %v1185 = vunpack.c.l.b16 %v1146
          %v1186 = vunpack.c.l.b16 %v1147
          %v1187 = vunpack.c.l.b16 %v1148
          %v1188 = vunpack.c.l.b16 %v1149
          %v1189 = vunpack.c.l.b16 %v1150
          %v1190 = vunpack.c.l.b16 %v1151
          %v1191 = vunpack.c.l.b16 %v1152
          %v1192 = vunpack.c.l.b16 %v1153
          %v1193 = vunpack.c.l.b16 %v1154
          %v1194 = vunpack.c.l.b16 %v1155
          %v1195 = vunpack.c.l.b16 %v1156
          %v1196 = vunpack.c.l.b16 %v1157
          %v1197 = vpack.c.b16 %v1182, %v1181
          %v1198 = vpack.c.b16 %v1184, %v1183
          %v1199 = vpack.c.b16 %v1186, %v1185
          %v1200 = vpack.c.b16 %v1188, %v1187
          %v1201 = vpack.c.b16 %v1190, %v1189
          %v1202 = vpack.c.b16 %v1192, %v1191
          %v1203 = vpack.c.b16 %v1194, %v1193
          %v1204 = vpack.c.b16 %v1196, %v1195
          %1213 = vmatprep.subr.bf16.mxu0 0
          %1214 = vmatpush1.bf16.msra.mxu0 %v1197
          %1215 = vmatprep.subr.bf16.mxu0 0
          %1216 = vmatpush1.bf16.msra.mxu0 %v1198
          %1217 = vmatprep.subr.bf16.mxu0 0
          %1218 = vmatpush1.bf16.msra.mxu0 %v1199
          %1219 = vmatprep.subr.bf16.mxu0 0
          %1220 = vmatpush1.bf16.msra.mxu0 %v1200
          %1221 = vmatprep.subr.bf16.mxu0 0
          %1222 = vmatpush1.bf16.msra.mxu0 %v1201
          %1223 = vmatprep.subr.bf16.mxu0 0
          %1224 = vmatpush1.bf16.msra.mxu0 %v1202
          %1225 = vmatprep.subr.bf16.mxu0 0
          %1226 = vmatpush1.bf16.msra.mxu0 %v1203
          %1227 = vmatprep.subr.bf16.mxu0 0
          %1228 = vmatpush1.bf16.msra.mxu0 %v1204
          %1229 = vmatprep.subr.bf16.mxu0 0
          %1230 = vmatpush1.bf16.msra.mxu0 0
          %1231 = vmatprep.subr.bf16.mxu0 0
          %1232 = vmatpush1.bf16.msra.mxu0 0
          %1233 = vmatprep.subr.bf16.mxu0 0
          %1234 = vmatpush1.bf16.msra.mxu0 0
          %1235 = vmatprep.subr.bf16.mxu0 0
          %1236 = vmatpush1.bf16.msra.mxu0 0
          %1237 = vmatprep.subr.bf16.mxu0 0
          %1238 = vmatpush1.bf16.msra.mxu0 0
          %1239 = vmatprep.subr.bf16.mxu0 0
          %1240 = vmatpush1.bf16.msra.mxu0 0
          %1241 = vmatprep.subr.bf16.mxu0 0
          %1242 = vmatpush1.bf16.msra.mxu0 0
          %1243 = vmatprep.subr.bf16.mxu0 0
          %1244 = vmatpush1.bf16.msra.mxu0 0
          %1245 = vmatprep.mubr.bf16.mxu0 0
          %1246 = vmatmul.mubr.bf16.gmra.mrb[0].mxu0 %v1134
          %v1247 = vpop.f32.mrb[0].mxu0
          %v1248 = vadd.f32 %v1163, %v1247
          %v1249 = vpop.f32.mrb[0].mxu0
          %v1250 = vpop.f32.mrb[0].mxu0
          %v1251 = vadd.f32 %v1163, %v1250
          %v1252 = vpop.f32.mrb[0].mxu0
          %1253 = vmatprep.mubr.bf16.mxu0 0
          %1254 = vmatmul.mubr.bf16.gmra.mrb[0].mxu0 %v1135
          %v1255 = vpop.f32.mrb[0].mxu0
          %v1256 = vadd.f32 %v1163, %v1255
          %v1257 = vpop.f32.mrb[0].mxu0
          %v1258 = vpop.f32.mrb[0].mxu0
          %v1259 = vadd.f32 %v1163, %v1258
          %v1260 = vpop.f32.mrb[0].mxu0
          %1261 = vmatprep.mubr.bf16.mxu0 0
          %1262 = vmatmul.mubr.bf16.gmra.mrb[0].mxu0 %v1136
          %v1263 = vpop.f32.mrb[0].mxu0
          %v1264 = vadd.f32 %v1163, %v1263
          %v1265 = vpop.f32.mrb[0].mxu0
          %v1266 = vpop.f32.mrb[0].mxu0
          %v1267 = vadd.f32 %v1163, %v1266
          %v1268 = vpop.f32.mrb[0].mxu0
          %1269 = vmatprep.mubr.bf16.mxu0 0
          %1270 = vmatmul.mubr.bf16.gmra.mrb[0].mxu0 %v1137
          %v1271 = vpop.f32.mrb[0].mxu0
          %v1272 = vadd.f32 %v1163, %v1271
          %v1273 = vpop.f32.mrb[0].mxu0
          %v1274 = vpop.f32.mrb[0].mxu0
          %v1275 = vadd.f32 %v1163, %v1274
          %v1276 = vpop.f32.mrb[0].mxu0
          %1277 = vmatprep.mubr.bf16.mxu0 0
          %1278 = vmatmul.mubr.bf16.gmra.mrb[0].mxu0 %v1138
          %v1279 = vpop.f32.mrb[0].mxu0
          %v1280 = vadd.f32 %v1163, %v1279
          %v1281 = vpop.f32.mrb[0].mxu0
          %v1282 = vpop.f32.mrb[0].mxu0
          %v1283 = vadd.f32 %v1163, %v1282
          %v1284 = vpop.f32.mrb[0].mxu0
          %1285 = vmatprep.mubr.bf16.mxu0 0
          %1286 = vmatmul.mubr.bf16.gmra.mrb[0].mxu0 %v1139
          %v1287 = vpop.f32.mrb[0].mxu0
          %v1288 = vadd.f32 %v1163, %v1287
          %v1289 = vpop.f32.mrb[0].mxu0
          %v1290 = vpop.f32.mrb[0].mxu0
          %v1291 = vadd.f32 %v1163, %v1290
          %v1292 = vpop.f32.mrb[0].mxu0
          %1293 = vmatprep.mubr.bf16.mxu0 0
          %1294 = vmatmul.mubr.bf16.gmra.mrb[0].mxu0 %v1140
          %v1295 = vpop.f32.mrb[0].mxu0
          %v1296 = vadd.f32 %v1163, %v1295
          %v1297 = vpop.f32.mrb[0].mxu0
          %v1298 = vpop.f32.mrb[0].mxu0
          %v1299 = vadd.f32 %v1163, %v1298
          %v1300 = vpop.f32.mrb[0].mxu0
          %1301 = vmatprep.mubr.bf16.mxu0 0
          %1302 = vmatmul.mubr.bf16.gmra.mrb[0].mxu0 %v1141
          %v1303 = vpop.f32.mrb[0].mxu0
          %v1304 = vadd.f32 %v1163, %v1303
          %v1305 = vpop.f32.mrb[0].mxu0
          %v1306 = vpop.f32.mrb[0].mxu0
          %v1307 = vadd.f32 %v1163, %v1306
          %v1308 = vpop.f32.mrb[0].mxu0
          %1309 = vdwg.mxu0
          %s1310 = sshra.s32 %s824, 3
          %s1311 = sand.u32 %s824, 7
          %s1312 = smul.addr %s1310, 4
          %s1313 = scalar_lea.vmem [#allocation3], %s1312
          %v1314 = vld [vmem:[%s1313] sm:$0xf]
          %v1315 = vld [vmem:[%s1313 + $0x4] sm:$0xf]
          %v1316 = vld [vmem:[%s1313 + $0x8] sm:$0xf]
          %v1317 = vld [vmem:[%s1313 + $0xc] sm:$0xf]
          %v1318 = vld [vmem:[%s1313 + $0x10] sm:$0xf]
          %v1319 = vld [vmem:[%s1313 + $0x14] sm:$0xf]
          %v1320 = vld [vmem:[%s1313 + $0x18] sm:$0xf]
          %v1321 = vld [vmem:[%s1313 + $0x1c] sm:$0xf]
          %v1322 = vld [vmem:[%s1313 + $0x20] sm:$0xf]
          %v1323 = vld [vmem:[%s1313 + $0x24] sm:$0xf]
          %v1324 = vld [vmem:[%s1313 + $0x28] sm:$0xf]
          %v1325 = vld [vmem:[%s1313 + $0x2c] sm:$0xf]
          %v1326 = vld [vmem:[%s1313 + $0x30] sm:$0xf]
          %v1327 = vld [vmem:[%s1313 + $0x34] sm:$0xf]
          %v1328 = vld [vmem:[%s1313 + $0x38] sm:$0xf]
          %v1329 = vld [vmem:[%s1313 + $0x3c] sm:$0xf]
          %v1330 = vld [vmem:[%s792] sm:$0x1]
          %v1332 = vlaneseq
          %v1333 = vshrl.u32 %v1332, 7
          %v1334 = vsub.s32 0, %v1333
          %v1335 = vrot.slane %v1330, %v1334
          %v1353 = vunpack.c.l.b16 %v1314
          %v1354 = vunpack.c.l.b16 %v1315
          %v1355 = vunpack.c.l.b16 %v1316
          %v1356 = vunpack.c.l.b16 %v1317
          %v1357 = vunpack.c.l.b16 %v1318
          %v1358 = vunpack.c.l.b16 %v1319
          %v1359 = vunpack.c.l.b16 %v1320
          %v1360 = vunpack.c.l.b16 %v1321
          %v1361 = vunpack.c.l.b16 %v1322
          %v1362 = vunpack.c.l.b16 %v1323
          %v1363 = vunpack.c.l.b16 %v1324
          %v1364 = vunpack.c.l.b16 %v1325
          %v1365 = vunpack.c.l.b16 %v1326
          %v1366 = vunpack.c.l.b16 %v1327
          %v1367 = vunpack.c.l.b16 %v1328
          %v1368 = vunpack.c.l.b16 %v1329
          %v1369 = vpack.c.b16 %v1354, %v1353
          %v1370 = vpack.c.b16 %v1356, %v1355
          %v1371 = vpack.c.b16 %v1358, %v1357
          %v1372 = vpack.c.b16 %v1360, %v1359
          %v1373 = vpack.c.b16 %v1362, %v1361
          %v1374 = vpack.c.b16 %v1364, %v1363
          %v1375 = vpack.c.b16 %v1366, %v1365
          %v1376 = vpack.c.b16 %v1368, %v1367
          %1385 = vmatprep.subr.bf16.mxu0 0
          %1386 = vmatpush1.bf16.msra.mxu0 %v1121
          %1387 = vmatprep.subr.bf16.mxu0 0
          %1388 = vmatpush1.bf16.msra.mxu0 %v1122
          %1389 = vmatprep.subr.bf16.mxu0 0
          %1390 = vmatpush1.bf16.msra.mxu0 %v1123
          %1391 = vmatprep.subr.bf16.mxu0 0
          %1392 = vmatpush1.bf16.msra.mxu0 %v1124
          %1393 = vmatprep.subr.bf16.mxu0 0
          %1394 = vmatpush1.bf16.msra.mxu0 %v1125
          %1395 = vmatprep.subr.bf16.mxu0 0
          %1396 = vmatpush1.bf16.msra.mxu0 %v1126
          %1397 = vmatprep.subr.bf16.mxu0 0
          %1398 = vmatpush1.bf16.msra.mxu0 %v1127
          %1399 = vmatprep.subr.bf16.mxu0 0
          %1400 = vmatpush1.bf16.msra.mxu0 %v1128
          %1401 = vmatprep.subr.bf16.mxu0 0
          %1402 = vmatpush1.bf16.msra.mxu0 0
          %1403 = vmatprep.subr.bf16.mxu0 0
          %1404 = vmatpush1.bf16.msra.mxu0 0
          %1405 = vmatprep.subr.bf16.mxu0 0
          %1406 = vmatpush1.bf16.msra.mxu0 0
          %1407 = vmatprep.subr.bf16.mxu0 0
          %1408 = vmatpush1.bf16.msra.mxu0 0
          %1409 = vmatprep.subr.bf16.mxu0 0
          %1410 = vmatpush1.bf16.msra.mxu0 0
          %1411 = vmatprep.subr.bf16.mxu0 0
          %1412 = vmatpush1.bf16.msra.mxu0 0
          %1413 = vmatprep.subr.bf16.mxu0 0
          %1414 = vmatpush1.bf16.msra.mxu0 0
          %1415 = vmatprep.subr.bf16.mxu0 0
          %1416 = vmatpush1.bf16.msra.mxu0 0
          %1417 = vmatprep.mubr.bf16.mxu0 0
          %1418 = vmatmul.mubr.bf16.gmra.mrb[0].mxu0 %v1369
          %v1419 = vpop.f32.mrb[0].mxu0
          %v1420 = vadd.f32 %v1335, %v1419
          %v1421 = vpop.f32.mrb[0].mxu0
          %v1422 = vpop.f32.mrb[0].mxu0
          %v1423 = vadd.f32 %v1335, %v1422
          %v1424 = vpop.f32.mrb[0].mxu0
          %1425 = vmatprep.mubr.bf16.mxu0 0
          %1426 = vmatmul.mubr.bf16.gmra.mrb[0].mxu0 %v1370
          %v1427 = vpop.f32.mrb[0].mxu0
          %v1428 = vadd.f32 %v1335, %v1427
          %v1429 = vpop.f32.mrb[0].mxu0
          %v1430 = vpop.f32.mrb[0].mxu0
          %v1431 = vadd.f32 %v1335, %v1430
          %v1432 = vpop.f32.mrb[0].mxu0
          %1433 = vmatprep.mubr.bf16.mxu0 0
          %1434 = vmatmul.mubr.bf16.gmra.mrb[0].mxu0 %v1371
          %v1435 = vpop.f32.mrb[0].mxu0
          %v1436 = vadd.f32 %v1335, %v1435
          %v1437 = vpop.f32.mrb[0].mxu0
          %v1438 = vpop.f32.mrb[0].mxu0
          %v1439 = vadd.f32 %v1335, %v1438
          %v1440 = vpop.f32.mrb[0].mxu0
          %1441 = vmatprep.mubr.bf16.mxu0 0
          %1442 = vmatmul.mubr.bf16.gmra.mrb[0].mxu0 %v1372
          %v1443 = vpop.f32.mrb[0].mxu0
          %v1444 = vadd.f32 %v1335, %v1443
          %v1445 = vpop.f32.mrb[0].mxu0
          %v1446 = vpop.f32.mrb[0].mxu0
          %v1447 = vadd.f32 %v1335, %v1446
          %v1448 = vpop.f32.mrb[0].mxu0
          %1449 = vmatprep.mubr.bf16.mxu0 0
          %1450 = vmatmul.mubr.bf16.gmra.mrb[0].mxu0 %v1373
          %v1451 = vpop.f32.mrb[0].mxu0
          %v1452 = vadd.f32 %v1335, %v1451
          %v1453 = vpop.f32.mrb[0].mxu0
          %v1454 = vpop.f32.mrb[0].mxu0
          %v1455 = vadd.f32 %v1335, %v1454
          %v1456 = vpop.f32.mrb[0].mxu0
          %1457 = vmatprep.mubr.bf16.mxu0 0
          %1458 = vmatmul.mubr.bf16.gmra.mrb[0].mxu0 %v1374
          %v1459 = vpop.f32.mrb[0].mxu0
          %v1460 = vadd.f32 %v1335, %v1459
          %v1461 = vpop.f32.mrb[0].mxu0
          %v1462 = vpop.f32.mrb[0].mxu0
          %v1463 = vadd.f32 %v1335, %v1462
          %v1464 = vpop.f32.mrb[0].mxu0
          %1465 = vmatprep.mubr.bf16.mxu0 0
          %1466 = vmatmul.mubr.bf16.gmra.mrb[0].mxu0 %v1375
          %v1467 = vpop.f32.mrb[0].mxu0
          %v1468 = vadd.f32 %v1335, %v1467
          %v1469 = vpop.f32.mrb[0].mxu0
          %v1470 = vpop.f32.mrb[0].mxu0
          %v1471 = vadd.f32 %v1335, %v1470
          %v1472 = vpop.f32.mrb[0].mxu0
          %1473 = vmatprep.mubr.bf16.mxu0 0
          %1474 = vmatmul.mubr.bf16.gmra.mrb[0].mxu0 %v1376
          %v1475 = vpop.f32.mrb[0].mxu0
          %v1476 = vadd.f32 %v1335, %v1475
          %v1477 = vpop.f32.mrb[0].mxu0
          %v1478 = vpop.f32.mrb[0].mxu0
          %v1479 = vadd.f32 %v1335, %v1478
          %v1480 = vpop.f32.mrb[0].mxu0
          %1481 = vdwg.mxu0
          %v1482 = vpack.c.bf16 %v1423, %v1420
          %v1483 = vpack.c.bf16 %v1431, %v1428
          %v1484 = vpack.c.bf16 %v1439, %v1436
          %v1485 = vpack.c.bf16 %v1447, %v1444
          %v1486 = vpack.c.bf16 %v1455, %v1452
          %v1487 = vpack.c.bf16 %v1463, %v1460
          %v1488 = vpack.c.bf16 %v1471, %v1468
          %v1489 = vpack.c.bf16 %v1479, %v1476
          %v1490 = vld [vmem:[%s677] sm:$0xf]
          %v1491 = vld [vmem:[%s677 + $0x4] sm:$0xf]
          %v1492 = vld [vmem:[%s677 + $0x8] sm:$0xf]
          %v1493 = vld [vmem:[%s677 + $0xc] sm:$0xf]
          %v1494 = vld [vmem:[%s677 + $0x10] sm:$0xf]
          %v1495 = vld [vmem:[%s677 + $0x14] sm:$0xf]
          %v1496 = vld [vmem:[%s677 + $0x18] sm:$0xf]
          %v1497 = vld [vmem:[%s677 + $0x1c] sm:$0xf]
          %v1498 = vld [vmem:[%s677 + $0x20] sm:$0xf]
          %v1499 = vld [vmem:[%s677 + $0x24] sm:$0xf]
          %v1500 = vld [vmem:[%s677 + $0x28] sm:$0xf]
          %v1501 = vld [vmem:[%s677 + $0x2c] sm:$0xf]
          %v1502 = vld [vmem:[%s677 + $0x30] sm:$0xf]
          %v1503 = vld [vmem:[%s677 + $0x34] sm:$0xf]
          %v1504 = vld [vmem:[%s677 + $0x38] sm:$0xf]
          %v1505 = vld [vmem:[%s677 + $0x3c] sm:$0xf]
          %v1506 = vld [vmem:[%s804] sm:$0x1]
          %v1508 = vlaneseq
          %v1509 = vshrl.u32 %v1508, 7
          %v1510 = vsub.s32 0, %v1509
          %v1511 = vrot.slane %v1506, %v1510
          %v1529 = vunpack.c.l.b16 %v1490
          %v1530 = vunpack.c.l.b16 %v1491
          %v1531 = vunpack.c.l.b16 %v1492
          %v1532 = vunpack.c.l.b16 %v1493
          %v1533 = vunpack.c.l.b16 %v1494
          %v1534 = vunpack.c.l.b16 %v1495
          %v1535 = vunpack.c.l.b16 %v1496
          %v1536 = vunpack.c.l.b16 %v1497
          %v1537 = vunpack.c.l.b16 %v1498
          %v1538 = vunpack.c.l.b16 %v1499
          %v1539 = vunpack.c.l.b16 %v1500
          %v1540 = vunpack.c.l.b16 %v1501
          %v1541 = vunpack.c.l.b16 %v1502
          %v1542 = vunpack.c.l.b16 %v1503
          %v1543 = vunpack.c.l.b16 %v1504
          %v1544 = vunpack.c.l.b16 %v1505
          %v1545 = vpack.c.b16 %v1530, %v1529
          %v1546 = vpack.c.b16 %v1532, %v1531
          %v1547 = vpack.c.b16 %v1534, %v1533
          %v1548 = vpack.c.b16 %v1536, %v1535
          %v1549 = vpack.c.b16 %v1538, %v1537
          %v1550 = vpack.c.b16 %v1540, %v1539
          %v1551 = vpack.c.b16 %v1542, %v1541
          %v1552 = vpack.c.b16 %v1544, %v1543
          %1561 = vmatprep.subr.bf16.mxu0 0
          %1562 = vmatpush1.bf16.msra.mxu0 %v1545
          %1563 = vmatprep.subr.bf16.mxu0 0
          %1564 = vmatpush1.bf16.msra.mxu0 %v1546
          %1565 = vmatprep.subr.bf16.mxu0 0
          %1566 = vmatpush1.bf16.msra.mxu0 %v1547
          %1567 = vmatprep.subr.bf16.mxu0 0
          %1568 = vmatpush1.bf16.msra.mxu0 %v1548
          %1569 = vmatprep.subr.bf16.mxu0 0
          %1570 = vmatpush1.bf16.msra.mxu0 %v1549
          %1571 = vmatprep.subr.bf16.mxu0 0
          %1572 = vmatpush1.bf16.msra.mxu0 %v1550
          %1573 = vmatprep.subr.bf16.mxu0 0
          %1574 = vmatpush1.bf16.msra.mxu0 %v1551
          %1575 = vmatprep.subr.bf16.mxu0 0
          %1576 = vmatpush1.bf16.msra.mxu0 %v1552
          %1577 = vmatprep.subr.bf16.mxu0 0
          %1578 = vmatpush1.bf16.msra.mxu0 0
          %1579 = vmatprep.subr.bf16.mxu0 0
          %1580 = vmatpush1.bf16.msra.mxu0 0
          %1581 = vmatprep.subr.bf16.mxu0 0
          %1582 = vmatpush1.bf16.msra.mxu0 0
          %1583 = vmatprep.subr.bf16.mxu0 0
          %1584 = vmatpush1.bf16.msra.mxu0 0
          %1585 = vmatprep.subr.bf16.mxu0 0
          %1586 = vmatpush1.bf16.msra.mxu0 0
          %1587 = vmatprep.subr.bf16.mxu0 0
          %1588 = vmatpush1.bf16.msra.mxu0 0
          %1589 = vmatprep.subr.bf16.mxu0 0
          %1590 = vmatpush1.bf16.msra.mxu0 0
          %1591 = vmatprep.subr.bf16.mxu0 0
          %1592 = vmatpush1.bf16.msra.mxu0 0
          %1593 = vmatprep.mubr.bf16.mxu0 0
          %1594 = vmatmul.mubr.bf16.gmra.mrb[0].mxu0 %v1482
          %v1595 = vpop.f32.mrb[0].mxu0
          %v1596 = vadd.f32 %v1511, %v1595
          %v1597 = vpop.f32.mrb[0].mxu0
          %v1598 = vpop.f32.mrb[0].mxu0
          %v1599 = vadd.f32 %v1511, %v1598
          %v1600 = vpop.f32.mrb[0].mxu0
          %1601 = vmatprep.mubr.bf16.mxu0 0
          %1602 = vmatmul.mubr.bf16.gmra.mrb[0].mxu0 %v1483
          %v1603 = vpop.f32.mrb[0].mxu0
          %v1604 = vadd.f32 %v1511, %v1603
          %v1605 = vpop.f32.mrb[0].mxu0
          %v1606 = vpop.f32.mrb[0].mxu0
          %v1607 = vadd.f32 %v1511, %v1606
          %v1608 = vpop.f32.mrb[0].mxu0
          %1609 = vmatprep.mubr.bf16.mxu0 0
          %1610 = vmatmul.mubr.bf16.gmra.mrb[0].mxu0 %v1484
          %v1611 = vpop.f32.mrb[0].mxu0
          %v1612 = vadd.f32 %v1511, %v1611
          %v1613 = vpop.f32.mrb[0].mxu0
          %v1614 = vpop.f32.mrb[0].mxu0
          %v1615 = vadd.f32 %v1511, %v1614
          %v1616 = vpop.f32.mrb[0].mxu0
          %1617 = vmatprep.mubr.bf16.mxu0 0
          %1618 = vmatmul.mubr.bf16.gmra.mrb[0].mxu0 %v1485
          %v1619 = vpop.f32.mrb[0].mxu0
          %v1620 = vadd.f32 %v1511, %v1619
          %v1621 = vpop.f32.mrb[0].mxu0
          %v1622 = vpop.f32.mrb[0].mxu0
          %v1623 = vadd.f32 %v1511, %v1622
          %v1624 = vpop.f32.mrb[0].mxu0
          %1625 = vmatprep.mubr.bf16.mxu0 0
          %1626 = vmatmul.mubr.bf16.gmra.mrb[0].mxu0 %v1486
          %v1627 = vpop.f32.mrb[0].mxu0
          %v1628 = vadd.f32 %v1511, %v1627
          %v1629 = vpop.f32.mrb[0].mxu0
          %v1630 = vpop.f32.mrb[0].mxu0
          %v1631 = vadd.f32 %v1511, %v1630
          %v1632 = vpop.f32.mrb[0].mxu0
          %1633 = vmatprep.mubr.bf16.mxu0 0
          %1634 = vmatmul.mubr.bf16.gmra.mrb[0].mxu0 %v1487
          %v1635 = vpop.f32.mrb[0].mxu0
          %v1636 = vadd.f32 %v1511, %v1635
          %v1637 = vpop.f32.mrb[0].mxu0
          %v1638 = vpop.f32.mrb[0].mxu0
          %v1639 = vadd.f32 %v1511, %v1638
          %v1640 = vpop.f32.mrb[0].mxu0
          %1641 = vmatprep.mubr.bf16.mxu0 0
          %1642 = vmatmul.mubr.bf16.gmra.mrb[0].mxu0 %v1488
          %v1643 = vpop.f32.mrb[0].mxu0
          %v1644 = vadd.f32 %v1511, %v1643
          %v1645 = vpop.f32.mrb[0].mxu0
          %v1646 = vpop.f32.mrb[0].mxu0
          %v1647 = vadd.f32 %v1511, %v1646
          %v1648 = vpop.f32.mrb[0].mxu0
          %1649 = vmatprep.mubr.bf16.mxu0 0
          %1650 = vmatmul.mubr.bf16.gmra.mrb[0].mxu0 %v1489
          %v1651 = vpop.f32.mrb[0].mxu0
          %v1652 = vadd.f32 %v1511, %v1651
          %v1653 = vpop.f32.mrb[0].mxu0
          %v1654 = vpop.f32.mrb[0].mxu0
          %v1655 = vadd.f32 %v1511, %v1654
          %v1656 = vpop.f32.mrb[0].mxu0
          %1657 = vdwg.mxu0
          %v1658 = vmax.f32 %v1596, 0.0
          %v1659 = vmax.f32 %v1599, 0.0
          %v1660 = vmax.f32 %v1604, 0.0
          %v1661 = vmax.f32 %v1607, 0.0
          %v1662 = vmax.f32 %v1612, 0.0
          %v1663 = vmax.f32 %v1615, 0.0
          %v1664 = vmax.f32 %v1620, 0.0
          %v1665 = vmax.f32 %v1623, 0.0
          %v1666 = vmax.f32 %v1628, 0.0
          %v1667 = vmax.f32 %v1631, 0.0
          %v1668 = vmax.f32 %v1636, 0.0
          %v1669 = vmax.f32 %v1639, 0.0
          %v1670 = vmax.f32 %v1644, 0.0
          %v1671 = vmax.f32 %v1647, 0.0
          %v1672 = vmax.f32 %v1652, 0.0
          %v1673 = vmax.f32 %v1655, 0.0
          %v1674 = vpack.c.bf16 %v1659, %v1658
          %v1675 = vpack.c.bf16 %v1661, %v1660
          %v1676 = vpack.c.bf16 %v1663, %v1662
          %v1677 = vpack.c.bf16 %v1665, %v1664
          %v1678 = vpack.c.bf16 %v1667, %v1666
          %v1679 = vpack.c.bf16 %v1669, %v1668
          %v1680 = vpack.c.bf16 %v1671, %v1670
          %v1681 = vpack.c.bf16 %v1673, %v1672
          %v1682 = vld [vmem:[%s686] sm:$0xf]
          %v1683 = vld [vmem:[%s686 + $0x4] sm:$0xf]
          %v1684 = vld [vmem:[%s686 + $0x8] sm:$0xf]
          %v1685 = vld [vmem:[%s686 + $0xc] sm:$0xf]
          %v1686 = vld [vmem:[%s686 + $0x10] sm:$0xf]
          %v1687 = vld [vmem:[%s686 + $0x14] sm:$0xf]
          %v1688 = vld [vmem:[%s686 + $0x18] sm:$0xf]
          %v1689 = vld [vmem:[%s686 + $0x1c] sm:$0xf]
          %v1690 = vld [vmem:[%s686 + $0x20] sm:$0xf]
          %v1691 = vld [vmem:[%s686 + $0x24] sm:$0xf]
          %v1692 = vld [vmem:[%s686 + $0x28] sm:$0xf]
          %v1693 = vld [vmem:[%s686 + $0x2c] sm:$0xf]
          %v1694 = vld [vmem:[%s686 + $0x30] sm:$0xf]
          %v1695 = vld [vmem:[%s686 + $0x34] sm:$0xf]
          %v1696 = vld [vmem:[%s686 + $0x38] sm:$0xf]
          %v1697 = vld [vmem:[%s686 + $0x3c] sm:$0xf]
          %v1698 = vld [vmem:[%s816] sm:$0x1]
          %v1700 = vlaneseq
          %v1701 = vshrl.u32 %v1700, 7
          %v1702 = vsub.s32 0, %v1701
          %v1703 = vrot.slane %v1698, %v1702
          %v1721 = vunpack.c.l.b16 %v1682
          %v1722 = vunpack.c.l.b16 %v1683
          %v1723 = vunpack.c.l.b16 %v1684
          %v1724 = vunpack.c.l.b16 %v1685
          %v1725 = vunpack.c.l.b16 %v1686
          %v1726 = vunpack.c.l.b16 %v1687
          %v1727 = vunpack.c.l.b16 %v1688
          %v1728 = vunpack.c.l.b16 %v1689
          %v1729 = vunpack.c.l.b16 %v1690
          %v1730 = vunpack.c.l.b16 %v1691
          %v1731 = vunpack.c.l.b16 %v1692
          %v1732 = vunpack.c.l.b16 %v1693
          %v1733 = vunpack.c.l.b16 %v1694
          %v1734 = vunpack.c.l.b16 %v1695
          %v1735 = vunpack.c.l.b16 %v1696
          %v1736 = vunpack.c.l.b16 %v1697
          %v1737 = vpack.c.b16 %v1722, %v1721
          %v1738 = vpack.c.b16 %v1724, %v1723
          %v1739 = vpack.c.b16 %v1726, %v1725
          %v1740 = vpack.c.b16 %v1728, %v1727
          %v1741 = vpack.c.b16 %v1730, %v1729
          %v1742 = vpack.c.b16 %v1732, %v1731
          %v1743 = vpack.c.b16 %v1734, %v1733
          %v1744 = vpack.c.b16 %v1736, %v1735
          %1753 = vmatprep.subr.bf16.mxu0 0
          %1754 = vmatpush1.bf16.msra.mxu0 %v1737
          %1755 = vmatprep.subr.bf16.mxu0 0
          %1756 = vmatpush1.bf16.msra.mxu0 %v1738
          %1757 = vmatprep.subr.bf16.mxu0 0
          %1758 = vmatpush1.bf16.msra.mxu0 %v1739
          %1759 = vmatprep.subr.bf16.mxu0 0
          %1760 = vmatpush1.bf16.msra.mxu0 %v1740
          %1761 = vmatprep.subr.bf16.mxu0 0
          %1762 = vmatpush1.bf16.msra.mxu0 %v1741
          %1763 = vmatprep.subr.bf16.mxu0 0
          %1764 = vmatpush1.bf16.msra.mxu0 %v1742
          %1765 = vmatprep.subr.bf16.mxu0 0
          %1766 = vmatpush1.bf16.msra.mxu0 %v1743
          %1767 = vmatprep.subr.bf16.mxu0 0
          %1768 = vmatpush1.bf16.msra.mxu0 %v1744
          %1769 = vmatprep.subr.bf16.mxu0 0
          %1770 = vmatpush1.bf16.msra.mxu0 0
          %1771 = vmatprep.subr.bf16.mxu0 0
          %1772 = vmatpush1.bf16.msra.mxu0 0
          %1773 = vmatprep.subr.bf16.mxu0 0
          %1774 = vmatpush1.bf16.msra.mxu0 0
          %1775 = vmatprep.subr.bf16.mxu0 0
          %1776 = vmatpush1.bf16.msra.mxu0 0
          %1777 = vmatprep.subr.bf16.mxu0 0
          %1778 = vmatpush1.bf16.msra.mxu0 0
          %1779 = vmatprep.subr.bf16.mxu0 0
          %1780 = vmatpush1.bf16.msra.mxu0 0
          %1781 = vmatprep.subr.bf16.mxu0 0
          %1782 = vmatpush1.bf16.msra.mxu0 0
          %1783 = vmatprep.subr.bf16.mxu0 0
          %1784 = vmatpush1.bf16.msra.mxu0 0
          %1785 = vmatprep.mubr.bf16.mxu0 0
          %1786 = vmatmul.mubr.bf16.gmra.mrb[0].mxu0 %v1674
          %v1787 = vpop.f32.mrb[0].mxu0
          %v1788 = vadd.f32 %v1703, %v1787
          %v1789 = vpop.f32.mrb[0].mxu0
          %v1790 = vpop.f32.mrb[0].mxu0
          %v1791 = vadd.f32 %v1703, %v1790
          %v1792 = vpop.f32.mrb[0].mxu0
          %1793 = vmatprep.mubr.bf16.mxu0 0
          %1794 = vmatmul.mubr.bf16.gmra.mrb[0].mxu0 %v1675
          %v1795 = vpop.f32.mrb[0].mxu0
          %v1796 = vadd.f32 %v1703, %v1795
          %v1797 = vpop.f32.mrb[0].mxu0
          %v1798 = vpop.f32.mrb[0].mxu0
          %v1799 = vadd.f32 %v1703, %v1798
          %v1800 = vpop.f32.mrb[0].mxu0
          %1801 = vmatprep.mubr.bf16.mxu0 0
          %1802 = vmatmul.mubr.bf16.gmra.mrb[0].mxu0 %v1676
          %v1803 = vpop.f32.mrb[0].mxu0
          %v1804 = vadd.f32 %v1703, %v1803
          %v1805 = vpop.f32.mrb[0].mxu0
          %v1806 = vpop.f32.mrb[0].mxu0
          %v1807 = vadd.f32 %v1703, %v1806
          %v1808 = vpop.f32.mrb[0].mxu0
          %1809 = vmatprep.mubr.bf16.mxu0 0
          %1810 = vmatmul.mubr.bf16.gmra.mrb[0].mxu0 %v1677
          %v1811 = vpop.f32.mrb[0].mxu0
          %v1812 = vadd.f32 %v1703, %v1811
          %v1813 = vpop.f32.mrb[0].mxu0
          %v1814 = vpop.f32.mrb[0].mxu0
          %v1815 = vadd.f32 %v1703, %v1814
          %v1816 = vpop.f32.mrb[0].mxu0
          %1817 = vmatprep.mubr.bf16.mxu0 0
          %1818 = vmatmul.mubr.bf16.gmra.mrb[0].mxu0 %v1678
          %v1819 = vpop.f32.mrb[0].mxu0
          %v1820 = vadd.f32 %v1703, %v1819
          %v1821 = vpop.f32.mrb[0].mxu0
          %v1822 = vpop.f32.mrb[0].mxu0
          %v1823 = vadd.f32 %v1703, %v1822
          %v1824 = vpop.f32.mrb[0].mxu0
          %1825 = vmatprep.mubr.bf16.mxu0 0
          %1826 = vmatmul.mubr.bf16.gmra.mrb[0].mxu0 %v1679
          %v1827 = vpop.f32.mrb[0].mxu0
          %v1828 = vadd.f32 %v1703, %v1827
          %v1829 = vpop.f32.mrb[0].mxu0
          %v1830 = vpop.f32.mrb[0].mxu0
          %v1831 = vadd.f32 %v1703, %v1830
          %v1832 = vpop.f32.mrb[0].mxu0
          %1833 = vmatprep.mubr.bf16.mxu0 0
          %1834 = vmatmul.mubr.bf16.gmra.mrb[0].mxu0 %v1680
          %v1835 = vpop.f32.mrb[0].mxu0
          %v1836 = vadd.f32 %v1703, %v1835
          %v1837 = vpop.f32.mrb[0].mxu0
          %v1838 = vpop.f32.mrb[0].mxu0
          %v1839 = vadd.f32 %v1703, %v1838
          %v1840 = vpop.f32.mrb[0].mxu0
          %1841 = vmatprep.mubr.bf16.mxu0 0
          %1842 = vmatmul.mubr.bf16.gmra.mrb[0].mxu0 %v1681
          %v1843 = vpop.f32.mrb[0].mxu0
          %v1844 = vadd.f32 %v1703, %v1843
          %v1845 = vpop.f32.mrb[0].mxu0
          %v1846 = vpop.f32.mrb[0].mxu0
          %v1847 = vadd.f32 %v1703, %v1846
          %v1848 = vpop.f32.mrb[0].mxu0
          %1849 = vdwg.mxu0
          %v1850 = vadd.f32 %v1248, %v1788
          %v1851 = vadd.f32 %v1251, %v1791
          %v1852 = vadd.f32 %v1256, %v1796
          %v1853 = vadd.f32 %v1259, %v1799
          %v1854 = vadd.f32 %v1264, %v1804
          %v1855 = vadd.f32 %v1267, %v1807
          %v1856 = vadd.f32 %v1272, %v1812
          %v1857 = vadd.f32 %v1275, %v1815
          %v1858 = vadd.f32 %v1280, %v1820
          %v1859 = vadd.f32 %v1283, %v1823
          %v1860 = vadd.f32 %v1288, %v1828
          %v1861 = vadd.f32 %v1291, %v1831
          %v1862 = vadd.f32 %v1296, %v1836
          %v1863 = vadd.f32 %v1299, %v1839
          %v1864 = vadd.f32 %v1304, %v1844
          %v1865 = vadd.f32 %v1307, %v1847
          %v1866 = vmax.f32 %v1850, 0.0
          %v1867 = vmax.f32 %v1851, 0.0
          %v1868 = vmax.f32 %v1852, 0.0
          %v1869 = vmax.f32 %v1853, 0.0
          %v1870 = vmax.f32 %v1854, 0.0
          %v1871 = vmax.f32 %v1855, 0.0
          %v1872 = vmax.f32 %v1856, 0.0
          %v1873 = vmax.f32 %v1857, 0.0
          %v1874 = vmax.f32 %v1858, 0.0
          %v1875 = vmax.f32 %v1859, 0.0
          %v1876 = vmax.f32 %v1860, 0.0
          %v1877 = vmax.f32 %v1861, 0.0
          %v1878 = vmax.f32 %v1862, 0.0
          %v1879 = vmax.f32 %v1863, 0.0
          %v1880 = vmax.f32 %v1864, 0.0
          %v1881 = vmax.f32 %v1865, 0.0
          %v1882 = vpack.c.bf16 %v1867, %v1866
          %v1883 = vpack.c.bf16 %v1869, %v1868
          %v1884 = vpack.c.bf16 %v1871, %v1870
          %v1885 = vpack.c.bf16 %v1873, %v1872
          %v1886 = vpack.c.bf16 %v1875, %v1874
          %v1887 = vpack.c.bf16 %v1877, %v1876
          %v1888 = vpack.c.bf16 %v1879, %v1878
          %v1889 = vpack.c.bf16 %v1881, %v1880
          %s1890 = sadd.s32 %s1116, %s824
          %s1891 = sshra.s32 %s1890, 4
          %s1892 = sand.u32 %s1890, 15
          %s1893 = smul.addr %s1891, 8
          %s1894 = scalar_lea.vmem [#allocation2], %s1893
          %1895 = vst [vmem:[%s1894] sm:$0xff] %v1882
          %1896 = vst [vmem:[%s1894 + $0x8] sm:$0xff] %v1883
          %1897 = vst [vmem:[%s1894 + $0x10] sm:$0xff] %v1884
          %1898 = vst [vmem:[%s1894 + $0x18] sm:$0xff] %v1885
          %1899 = vst [vmem:[%s1894 + $0x20] sm:$0xff] %v1886
          %1900 = vst [vmem:[%s1894 + $0x28] sm:$0xff] %v1887
          %1901 = vst [vmem:[%s1894 + $0x30] sm:$0xff] %v1888
          %1902 = vst [vmem:[%s1894 + $0x38] sm:$0xff] %v1889
        $region108: #{tpu_custom_call.1} parent=71 // pred_fallthru
          _
        %p1903 = scmp.eq.s32.totalorder %s41, 2
        // Predicated region
        $region109: #{tpu_custom_call.1} parent=71 // pred_check
          %p1904 = pneg %p1903
        $region110: #{tpu_custom_call.1} parent=71 // pred_check_branch
          %1906 = sbr.rel (%p1904) target = $region112
        $region111: #{tpu_custom_call.1} parent=71 // pred_region
          %s1907 = sshra.s32 %s824, 4
          %s1908 = sand.u32 %s824, 15
          %s1909 = smul.addr %s1907, 8
          %s1910 = scalar_lea.vmem [#allocation2], %s1909
          %v1911 = vld [vmem:[%s1910] sm:$0xff]
          %v1912 = vld [vmem:[%s1910 + $0x8] sm:$0xff]
          %v1913 = vld [vmem:[%s1910 + $0x10] sm:$0xff]
          %v1914 = vld [vmem:[%s1910 + $0x18] sm:$0xff]
          %v1915 = vld [vmem:[%s1910 + $0x20] sm:$0xff]
          %v1916 = vld [vmem:[%s1910 + $0x28] sm:$0xff]
          %v1917 = vld [vmem:[%s1910 + $0x30] sm:$0xff]
          %v1918 = vld [vmem:[%s1910 + $0x38] sm:$0xff]
          %v1919 = vld [vmem:[#allocation14] sm:$0xf]
          %v1920 = vld [vmem:[#allocation14 + $0x4] sm:$0xf]
          %v1921 = vld [vmem:[#allocation14 + $0x8] sm:$0xf]
          %v1922 = vld [vmem:[#allocation14 + $0xc] sm:$0xf]
          %v1923 = vld [vmem:[#allocation14 + $0x10] sm:$0xf]
          %v1924 = vld [vmem:[#allocation14 + $0x14] sm:$0xf]
          %v1925 = vld [vmem:[#allocation14 + $0x18] sm:$0xf]
          %v1926 = vld [vmem:[#allocation14 + $0x1c] sm:$0xf]
          %v1927 = vld [vmem:[#allocation14 + $0x20] sm:$0xf]
          %v1928 = vld [vmem:[#allocation14 + $0x24] sm:$0xf]
          %v1929 = vld [vmem:[#allocation14 + $0x28] sm:$0xf]
          %v1930 = vld [vmem:[#allocation14 + $0x2c] sm:$0xf]
          %v1931 = vld [vmem:[#allocation14 + $0x30] sm:$0xf]
          %v1932 = vld [vmem:[#allocation14 + $0x34] sm:$0xf]
          %v1933 = vld [vmem:[#allocation14 + $0x38] sm:$0xf]
          %v1934 = vld [vmem:[#allocation14 + $0x3c] sm:$0xf]
          %v1935 = vld [vmem:[%s12] sm:$0x1]
          %v1937 = vlaneseq
          %v1938 = vshrl.u32 %v1937, 7
          %v1939 = vsub.s32 0, %v1938
          %v1940 = vrot.slane %v1935, %v1939
          %v1958 = vunpack.c.l.b16 %v1919
          %v1959 = vunpack.c.l.b16 %v1920
          %v1960 = vunpack.c.l.b16 %v1921
          %v1961 = vunpack.c.l.b16 %v1922
          %v1962 = vunpack.c.l.b16 %v1923
          %v1963 = vunpack.c.l.b16 %v1924
          %v1964 = vunpack.c.l.b16 %v1925
          %v1965 = vunpack.c.l.b16 %v1926
          %v1966 = vunpack.c.l.b16 %v1927
          %v1967 = vunpack.c.l.b16 %v1928
          %v1968 = vunpack.c.l.b16 %v1929
          %v1969 = vunpack.c.l.b16 %v1930
          %v1970 = vunpack.c.l.b16 %v1931
          %v1971 = vunpack.c.l.b16 %v1932
          %v1972 = vunpack.c.l.b16 %v1933
          %v1973 = vunpack.c.l.b16 %v1934
          %v1974 = vpack.c.b16 %v1959, %v1958
          %v1975 = vpack.c.b16 %v1961, %v1960
          %v1976 = vpack.c.b16 %v1963, %v1962
          %v1977 = vpack.c.b16 %v1965, %v1964
          %v1978 = vpack.c.b16 %v1967, %v1966
          %v1979 = vpack.c.b16 %v1969, %v1968
          %v1980 = vpack.c.b16 %v1971, %v1970
          %v1981 = vpack.c.b16 %v1973, %v1972
          %1990 = vmatprep.subr.bf16.mxu0 0
          %1991 = vmatpush1.bf16.msra.mxu0 %v1974
          %1992 = vmatprep.subr.bf16.mxu0 0
          %1993 = vmatpush1.bf16.msra.mxu0 %v1975
          %1994 = vmatprep.subr.bf16.mxu0 0
          %1995 = vmatpush1.bf16.msra.mxu0 %v1976
          %1996 = vmatprep.subr.bf16.mxu0 0
          %1997 = vmatpush1.bf16.msra.mxu0 %v1977
          %1998 = vmatprep.subr.bf16.mxu0 0
          %1999 = vmatpush1.bf16.msra.mxu0 %v1978
          %2000 = vmatprep.subr.bf16.mxu0 0
          %2001 = vmatpush1.bf16.msra.mxu0 %v1979
          %2002 = vmatprep.subr.bf16.mxu0 0
          %2003 = vmatpush1.bf16.msra.mxu0 %v1980
          %2004 = vmatprep.subr.bf16.mxu0 0
          %2005 = vmatpush1.bf16.msra.mxu0 %v1981
          %2006 = vmatprep.subr.bf16.mxu0 0
          %2007 = vmatpush1.bf16.msra.mxu0 0
          %2008 = vmatprep.subr.bf16.mxu0 0
          %2009 = vmatpush1.bf16.msra.mxu0 0
          %2010 = vmatprep.subr.bf16.mxu0 0
          %2011 = vmatpush1.bf16.msra.mxu0 0
          %2012 = vmatprep.subr.bf16.mxu0 0
          %2013 = vmatpush1.bf16.msra.mxu0 0
          %2014 = vmatprep.subr.bf16.mxu0 0
          %2015 = vmatpush1.bf16.msra.mxu0 0
          %2016 = vmatprep.subr.bf16.mxu0 0
          %2017 = vmatpush1.bf16.msra.mxu0 0
          %2018 = vmatprep.subr.bf16.mxu0 0
          %2019 = vmatpush1.bf16.msra.mxu0 0
          %2020 = vmatprep.subr.bf16.mxu0 0
          %2021 = vmatpush1.bf16.msra.mxu0 0
          %2022 = vmatprep.mubr.bf16.mxu0 0
          %2023 = vmatmul.mubr.bf16.gmra.mrb[0].mxu0 %v1911
          %v2024 = vpop.f32.mrb[0].mxu0
          %v2025 = vadd.f32 %v1940, %v2024
          %v2026 = vpop.f32.mrb[0].mxu0
          %v2027 = vpop.f32.mrb[0].mxu0
          %v2028 = vadd.f32 %v1940, %v2027
          %v2029 = vpop.f32.mrb[0].mxu0
          %2030 = vmatprep.mubr.bf16.mxu0 0
          %2031 = vmatmul.mubr.bf16.gmra.mrb[0].mxu0 %v1912
          %v2032 = vpop.f32.mrb[0].mxu0
          %v2033 = vadd.f32 %v1940, %v2032
          %v2034 = vpop.f32.mrb[0].mxu0
          %v2035 = vpop.f32.mrb[0].mxu0
          %v2036 = vadd.f32 %v1940, %v2035
          %v2037 = vpop.f32.mrb[0].mxu0
          %2038 = vmatprep.mubr.bf16.mxu0 0
          %2039 = vmatmul.mubr.bf16.gmra.mrb[0].mxu0 %v1913
          %v2040 = vpop.f32.mrb[0].mxu0
          %v2041 = vadd.f32 %v1940, %v2040
          %v2042 = vpop.f32.mrb[0].mxu0
          %v2043 = vpop.f32.mrb[0].mxu0
          %v2044 = vadd.f32 %v1940, %v2043
          %v2045 = vpop.f32.mrb[0].mxu0
          %2046 = vmatprep.mubr.bf16.mxu0 0
          %2047 = vmatmul.mubr.bf16.gmra.mrb[0].mxu0 %v1914
          %v2048 = vpop.f32.mrb[0].mxu0
          %v2049 = vadd.f32 %v1940, %v2048
          %v2050 = vpop.f32.mrb[0].mxu0
          %v2051 = vpop.f32.mrb[0].mxu0
          %v2052 = vadd.f32 %v1940, %v2051
          %v2053 = vpop.f32.mrb[0].mxu0
          %2054 = vmatprep.mubr.bf16.mxu0 0
          %2055 = vmatmul.mubr.bf16.gmra.mrb[0].mxu0 %v1915
          %v2056 = vpop.f32.mrb[0].mxu0
          %v2057 = vadd.f32 %v1940, %v2056
          %v2058 = vpop.f32.mrb[0].mxu0
          %v2059 = vpop.f32.mrb[0].mxu0
          %v2060 = vadd.f32 %v1940, %v2059
          %v2061 = vpop.f32.mrb[0].mxu0
          %2062 = vmatprep.mubr.bf16.mxu0 0
          %2063 = vmatmul.mubr.bf16.gmra.mrb[0].mxu0 %v1916
          %v2064 = vpop.f32.mrb[0].mxu0
          %v2065 = vadd.f32 %v1940, %v2064
          %v2066 = vpop.f32.mrb[0].mxu0
          %v2067 = vpop.f32.mrb[0].mxu0
          %v2068 = vadd.f32 %v1940, %v2067
          %v2069 = vpop.f32.mrb[0].mxu0
          %2070 = vmatprep.mubr.bf16.mxu0 0
          %2071 = vmatmul.mubr.bf16.gmra.mrb[0].mxu0 %v1917
          %v2072 = vpop.f32.mrb[0].mxu0
          %v2073 = vadd.f32 %v1940, %v2072
          %v2074 = vpop.f32.mrb[0].mxu0
          %v2075 = vpop.f32.mrb[0].mxu0
          %v2076 = vadd.f32 %v1940, %v2075
          %v2077 = vpop.f32.mrb[0].mxu0
          %2078 = vmatprep.mubr.bf16.mxu0 0
          %2079 = vmatmul.mubr.bf16.gmra.mrb[0].mxu0 %v1918
          %v2080 = vpop.f32.mrb[0].mxu0
          %v2081 = vadd.f32 %v1940, %v2080
          %v2082 = vpop.f32.mrb[0].mxu0
          %v2083 = vpop.f32.mrb[0].mxu0
          %v2084 = vadd.f32 %v1940, %v2083
          %v2085 = vpop.f32.mrb[0].mxu0
          %2086 = vdwg.mxu0
          %2087 = vst [vmem:[%s771] sm:$0xff] %v2025
          %2088 = vst [vmem:[%s771 + $0x8] sm:$0xff] %v2028
          %2089 = vst [vmem:[%s771 + $0x10] sm:$0xff] %v2033
          %2090 = vst [vmem:[%s771 + $0x18] sm:$0xff] %v2036
          %2091 = vst [vmem:[%s771 + $0x20] sm:$0xff] %v2041
          %2092 = vst [vmem:[%s771 + $0x28] sm:$0xff] %v2044
          %2093 = vst [vmem:[%s771 + $0x30] sm:$0xff] %v2049
          %2094 = vst [vmem:[%s771 + $0x38] sm:$0xff] %v2052
          %2095 = vst [vmem:[%s771 + $0x40] sm:$0xff] %v2057
          %2096 = vst [vmem:[%s771 + $0x48] sm:$0xff] %v2060
          %2097 = vst [vmem:[%s771 + $0x50] sm:$0xff] %v2065
          %2098 = vst [vmem:[%s771 + $0x58] sm:$0xff] %v2068
          %2099 = vst [vmem:[%s771 + $0x60] sm:$0xff] %v2073
          %2100 = vst [vmem:[%s771 + $0x68] sm:$0xff] %v2076
          %2101 = vst [vmem:[%s771 + $0x70] sm:$0xff] %v2081
          %2102 = vst [vmem:[%s771 + $0x78] sm:$0xff] %v2084
        $region112: #{tpu_custom_call.1} parent=71 // pred_fallthru
          _
        %s2103 = sand.u32 %s420, 1
        %s2104 = scalar_lea.sflag [#allocation5], %s2103
        %s2105 = sand.u32 %s420, 1
        %s2106 = smul.addr %s2105, 128
        %s2107 = scalar_lea.vmem [#allocation15], %s2106
        // Predicated region
        $region113: #{tpu_custom_call.1} parent=71 // pred_check
          %p2108 = pneg %p430
        $region114: #{tpu_custom_call.1} parent=71 // pred_check_branch
          %2110 = sbr.rel (%p2108) target = $region116
        $region115: #{tpu_custom_call.1} parent=71 // pred_region
          %p2111 = scmp.eq.s32.totalorder %s41, 2
          %s2112 = scalar_select %p2111, %s42, 0
          %s2113 = smul.u32 16, %s2112
          %s2115 = ssub.s32 2048, 2048
          %2116 = vsyncadd %s2104, %s2115
          %s2117 = smul.addr %s2113, 128
          %s2118 = scalar_lea.hbm %s13, %s2117
          %s2119 = sshll.u32 %s2107, 4
          %s2120 = int_to_ptr.vmem [resolvable:$true] %s2119
          %2125 = dma.vmem_to_hbm [thread:$0]  %s2120, 2048, %s2118, %s2104, 128, 128, 8
        $region116: #{tpu_custom_call.1} parent=71 // pred_fallthru
          _
      $region72: #{tpu_custom_call.1} parent=5 // pred_fallthru
        _
      %p2126 = scmp.le.s32.totalorder 2, %s32
      // Predicated region
      $region117: #{tpu_custom_call.1} parent=5 // pred_check
        %p2127 = pneg %p2126
      $region118: #{tpu_custom_call.1} parent=5 // pred_check_branch
        %2129 = sbr.rel (%p2127) target = $region120
      $region119: #{tpu_custom_call.1} parent=5 // pred_region
        %s2130 = ssub.s32 %s32, 2
        // Predicated region
        $region121: #{tpu_custom_call.1} parent=119 // pred_check
          %p2131 = pneg %p436
        $region122: #{tpu_custom_call.1} parent=119 // pred_check_branch
          %2133 = sbr.rel (%p2131) target = $region124
        $region123: #{tpu_custom_call.1} parent=119 // pred_region
          %s2134 = sand.u32 %s421, 1
          %s2135 = scalar_lea.sflag [#allocation5], %s2134
          %s2136 = sand.u32 %s421, 1
          %s2137 = smul.addr %s2136, 128
          %s2138 = scalar_lea.vmem [#allocation15], %s2137
          %2139 = dma.done %s2135, 2048
        $region124: #{tpu_custom_call.1} parent=119 // pred_fallthru
          _
      $region120: #{tpu_custom_call.1} parent=5 // pred_fallthru
        _
    $region6: #{tpu_custom_call.1} parent=1 // loop_footer
      %s36 = sadd.s32 1, %s32
    $region7: #{tpu_custom_call.1} parent=1 // loop_footer_branch
      %31 = sbr.rel target = $region3
    $region8: #{tpu_custom_call.1} parent=1 // loop_exit
      _
    %2140 = vsyncpa [#allocation4], 1
    %s2141 = scalar_lea.sflag [#allocation4], 1
    %2142 = vsyncpa %s2141, 1
    %2143 = vsyncpa [#allocation7], 1
    %s2144 = scalar_lea.sflag [#allocation7], 1
    %2145 = vsyncpa %s2144, 1
    %2146 = vsyncpa [#allocation10], 1
    %s2147 = scalar_lea.sflag [#allocation10], 1
    %2148 = vsyncpa %s2147, 1
    %2149 = vsyncpa [#allocation13], 1
    %s2150 = scalar_lea.sflag [#allocation13], 1
    %2151 = vsyncpa %s2150, 1
    %2152 = vsyncpa [#allocation5], 1
    %s2153 = scalar_lea.sflag [#allocation5], 1
    %2154 = vsyncpa %s2153, 1

</llo_original>
